<compile_context>
chip_gen: v5e
topology: v5e:2x2
jax: 0.10.0
libtpu: 0.0.40
codegen_flags: <defaults>
</compile_context>

<pallas_src>
import jax
import jax.numpy as jnp
import numpy as np
from jax.experimental import pallas as pl
from jax.experimental.pallas import tpu as pltpu


# ---------------------------------------------------------------------------
# Hardware-aware helpers
# ---------------------------------------------------------------------------
def _vmem_capacity_bytes():
    """Per-TensorCore VMEM capacity; conservative fallback if query fails."""
    try:
        info = pltpu.get_tpu_info()
        cap = getattr(info, "vmem_capacity_bytes", None)
        if cap:
            return int(cap)
    except Exception:
        pass
    return 64 * 1024 * 1024          # v7x per-core size == safe lower bound


def _vmem_limit_bytes(est_bytes, cap):
    # 2x headroom over the estimated resident footprint, clamped to 3/4 of the
    # physical per-core VMEM (48 MiB on v7x, 96 MiB on v5e/v6e).
    hi = (cap * 3) // 4
    return int(min(max(2 * est_bytes, 16 * 1024 * 1024), hi))


def _pick_row_tile(M, cap):
    # Prefer smaller row tiles on small-VMEM parts (v7x: 64 MiB/TC) so the
    # projection kernel keeps headroom at production sizes; bigger on v5e/v6e.
    prefer = (256, 512) if cap <= (64 << 20) else (512, 256)
    for tm in prefer + (128, 64, 32, 16, 8):
        if M % tm == 0:
            return tm
    return M        # full-extent block is always a legal tiling


def _pick_time_block(T):
    # Largest candidate that divides T and still leaves >= 2 grid steps
    # (so the pipeline can prefetch the next gates block).
    for tb in (8, 5, 4, 2):
        if T % tb == 0 and T // tb >= 2:
            return tb
    for tb in (8, 5, 4, 2):
        if T % tb == 0:
            return tb
    return 1


# ---------------------------------------------------------------------------
# Kernel 1: batched input projection  G = x0 @ W0 + x1 @ W1 + b   (all timesteps)
# ---------------------------------------------------------------------------
def _input_proj_kernel(x0_ref, x1_ref, b_ref, w0_ref, w1_ref, g_ref):
    x0 = x0_ref[...].astype(jnp.bfloat16)          # (tm, F0)  cast = MXU packing
    x1 = x1_ref[...].astype(jnp.bfloat16)          # (tm, F1)
    acc = (jnp.dot(x0, w0_ref[...], preferred_element_type=jnp.float32)
           + jnp.dot(x1, w1_ref[...], preferred_element_type=jnp.float32)
           + b_ref[...])                           # f32 bias, added once here
    g_ref[...] = acc.astype(g_ref.dtype)           # gates stored in bf16


# ---------------------------------------------------------------------------
# Kernel 2: sequential LSTM recurrence + fused residual add
# ---------------------------------------------------------------------------
def _sigmoid(x, approx=True):
    # sigmoid(x) = 1 / (1 + exp(-x)); approx reciprocal keeps the divide off
    # the EUP exp chain.  The forget gate uses approx=False (exact) so the
    # recirculated error through c stays bounded over long sequences.
    return pl.reciprocal(1.0 + jnp.exp(-x), approx=approx)


def _lstm_recurrent_kernel(g_ref, res_ref, whh_hbm, out_ref,
                           whh_v, h_ref, c_ref, sem):
    tb = pl.program_id(0)
    Tb = g_ref.shape[0]
    B, H = h_ref.shape

    def gate_math(gates, c_prev):
        i_g = _sigmoid(gates[:, 0 * H:1 * H])                  # PyTorch order i,f,g,o
        f_g = _sigmoid(gates[:, 1 * H:2 * H], approx=False)
        g_g = jnp.tanh(gates[:, 2 * H:3 * H])
        o_g = _sigmoid(gates[:, 3 * H:4 * H])
        c_new = f_g * c_prev + i_g * g_g
        h_new = o_g * jnp.tanh(c_new)
        return h_new, c_new

    def step(tt, h_prev, c_prev):
        gates = g_ref[tt].astype(jnp.float32) + jnp.dot(
            h_prev.astype(jnp.bfloat16), whh_v[...],
            preferred_element_type=jnp.float32)                # (B, 4H)
        h_new, c_new = gate_math(gates, c_prev)
        out_ref[tt] = (h_new + res_ref[tt]).astype(out_ref.dtype)
        return h_new, c_new

    @pl.when(tb == 0)
    def _():
        # Issue (don't wait) the one-time resident bf16 W_hh copy; it hides
        # behind step 0's gate math.  Global t == 0 has h_prev == 0, so the
        # recurrent matmul is identically zero and is skipped entirely.
        pltpu.make_async_copy(whh_hbm, whh_v, sem).start()
        gates0 = g_ref[0].astype(jnp.float32)
        h_new, c_new = gate_math(gates0, jnp.zeros((B, H), jnp.float32))
        h_ref[...] = h_new
        c_ref[...] = c_new
        out_ref[0] = (h_new + res_ref[0]).astype(out_ref.dtype)
        # First real use of whh_v is the next timestep's matmul.
        pltpu.make_async_copy(whh_hbm, whh_v, sem).wait()

    @pl.when(tb != 0)
    def _():
        h_new, c_new = step(0, h_ref[...], c_ref[...])
        h_ref[...] = h_new
        c_ref[...] = c_new

    # Remaining Tb-1 timesteps of this block: static bounds, fully unrolled so
    # the LLO scheduler sees the whole chain (amortizes per-grid-step overhead).
    def body(tt, carry):
        return step(tt, *carry)

    h_fin, c_fin = jax.lax.fori_loop(1, Tb, body,
                                     (h_ref[...], c_ref[...]), unroll=True)
    h_ref[...] = h_fin
    c_ref[...] = c_fin


# ---------------------------------------------------------------------------
# Wrapper
# ---------------------------------------------------------------------------
def stage7_forward(input1, input3, input0, params):
    """Pallas implementation of Stage7.forward. Returns (out6, out1)."""
    w0, w1, whh, b = params      # bf16 (F0,4H), bf16 (F1,4H), bf16 (H,4H), f32 (1,4H)
    T, B, F0 = input0.shape
    F1 = input1.shape[-1]
    H = whh.shape[0]
    G = 4 * H
    M = T * B
    cap = _vmem_capacity_bytes()

    # ---- 1) big non-recurrent GEMM over all T*B rows --------------------
    x0 = input0.reshape(M, F0)
    x1 = input1.reshape(M, F1)
    tm = _pick_row_tile(M, cap)

    proj_est = (2 * tm * (F0 + F1) * 4            # double-buffered x0/x1 blocks
                + 2 * tm * G * 2                  # double-buffered bf16 out blocks
                + 2 * (F0 + F1) * G * 2           # weights (worst case: 2 buffers)
                + 2 * G * 4)                      # bias
    proj_vmem = _vmem_limit_bytes(proj_est, cap)

    def run_proj(single_buffer_consts):
        # Constant-index (weight / bias) blocks never change across the row
        # grid; a second pipeline buffer for them is pure wasted VMEM (16 MiB
        # at production F=1024, 4H=4096), so request Buffered(1).
        if single_buffer_consts:
            def const_spec(shape):
                return pl.BlockSpec(shape, lambda m: (0, 0),
                                    pipeline_mode=pl.Buffered(1))
        else:
            def const_spec(shape):
                return pl.BlockSpec(shape, lambda m: (0, 0))

        call = pl.pallas_call(
            _input_proj_kernel,
            out_shape=jax.ShapeDtypeStruct((M, G), jnp.bfloat16),
            grid_spec=pltpu.PrefetchScalarGridSpec(
                num_scalar_prefetch=0,
                grid=(M // tm,),
                in_specs=[
                    pl.BlockSpec((tm, F0), lambda m: (m, 0)),   # x0 rows
                    pl.BlockSpec((tm, F1), lambda m: (m, 0)),   # x1 rows
                    const_spec((1, G)),                         # b_ih + b_hh
                    const_spec((F0, G)),                        # W_ih half (input0)
                    const_spec((F1, G)),                        # W_ih half (input1)
                ],
                out_specs=pl.BlockSpec((tm, G), lambda m: (m, 0)),
            ),
            compiler_params=pltpu.CompilerParams(
                dimension_semantics=("parallel",),
                vmem_limit_bytes=proj_vmem),
        )
        out = call(x0, x1, b, w0, w1)
        return jax.block_until_ready(out)

    try:
        gates = run_proj(True)
    except Exception:
        # pipeline_mode=Buffered(1) not supported on this build: fall back to
        # default double buffering (identical results, slightly more VMEM).
        gates = run_proj(False)

    gates = gates.reshape(T, B, G)

    # ---- 2) small sequential recurrence over T (Tb timesteps / grid step) ----
    # NOTE: for large production batches, a leading "parallel" batch-block grid
    # axis would let v7x split the recurrence across its 2 TensorCores (each
    # core owning its own h/c scratch); at B=8 it is not worthwhile.
    Tb = _pick_time_block(T)
    rec_est = (2 * Tb * B * G * 2                 # pipelined bf16 gates blocks
               + 2 * Tb * B * H * 4 * 2           # pipelined res / out blocks
               + H * G * 2                        # resident single-buffered W_hh
               + 2 * B * H * 4)                   # h / c scratch
    out6 = pl.pallas_call(
        _lstm_recurrent_kernel,
        out_shape=jax.ShapeDtypeStruct((T, B, H), jnp.float32),
        grid_spec=pltpu.PrefetchScalarGridSpec(
            num_scalar_prefetch=0,
            grid=(T // Tb,),
            in_specs=[
                pl.BlockSpec((Tb, B, G), lambda t: (t, 0, 0)),  # precomputed gates
                pl.BlockSpec((Tb, B, H), lambda t: (t, 0, 0)),  # residual (input3)
                pl.BlockSpec(memory_space=pl.ANY),              # W_hh (raw HBM ref)
            ],
            out_specs=pl.BlockSpec((Tb, B, H), lambda t: (t, 0, 0)),
            scratch_shapes=[
                pltpu.VMEM((H, G), jnp.bfloat16),   # resident W_hh (single buffer)
                pltpu.VMEM((B, H), jnp.float32),    # h state
                pltpu.VMEM((B, H), jnp.float32),    # c state
                pltpu.SemaphoreType.DMA,            # W_hh copy semaphore
            ],
        ),
        compiler_params=pltpu.CompilerParams(
            dimension_semantics=("arbitrary",),     # recurrence: sequential grid
            vmem_limit_bytes=_vmem_limit_bytes(rec_est, cap)),
    )(gates, input3, whh)

    # out1 = input1.clone() -> just pass the array through
    return out6, input1


# ---------------------------------------------------------------------------
# Pure-JAX reference (lax.scan LSTM) for correctness checking
# ---------------------------------------------------------------------------
def stage7_reference(input1, input3, input0, params):
    w0, w1, whh, b = params
    w_ih = jnp.concatenate([w0, w1], axis=0).astype(jnp.float32)   # (F0+F1, 4H)
    whh = whh.astype(jnp.float32)
    H = whh.shape[0]
    x = jnp.concatenate([input0, input1], axis=2)

    def step(carry, x_t):
        h, c = carry
        gates = x_t @ w_ih + h @ whh + b[0]
        i = jax.nn.sigmoid(gates[:, 0 * H:1 * H])
        f = jax.nn.sigmoid(gates[:, 1 * H:2 * H])
        g = jnp.tanh(gates[:, 2 * H:3 * H])
        o = jax.nn.sigmoid(gates[:, 3 * H:4 * H])
        c = f * c + i * g
        h = o * jnp.tanh(c)
        return (h, c), h

    B = input0.shape[1]
    h0 = jnp.zeros((B, H), jnp.float32)
    (_, _), hs = jax.lax.scan(step, (h0, h0), x)
    return hs + input3, input1


def make_params(key, f0, f1, hidden):
    """Deterministic LSTM params (PyTorch-style uniform init), pre-transposed.

    Weights are stored in bf16 (MXU-native, half the VMEM/HBM footprint);
    bias stays f32 and is folded into the precomputed input projection."""
    k1, k2, k3, k4 = jax.random.split(key, 4)
    bound = 1.0 / np.sqrt(hidden)
    w_ih = jax.random.uniform(k1, (4 * hidden, f0 + f1), jnp.float32, -bound, bound)
    w_hh = jax.random.uniform(k2, (4 * hidden, hidden), jnp.float32, -bound, bound)
    b_ih = jax.random.uniform(k3, (4 * hidden,), jnp.float32, -bound, bound)
    b_hh = jax.random.uniform(k4, (4 * hidden,), jnp.float32, -bound, bound)
    w_ih_t = w_ih.T                                   # (F0+F1, 4H)
    w0 = w_ih_t[:f0].astype(jnp.bfloat16)             # multiplies input0
    w1 = w_ih_t[f0:].astype(jnp.bfloat16)             # multiplies input1
    whh = w_hh.T.astype(jnp.bfloat16)                 # (H, 4H)
    b = (b_ih + b_hh)[None, :].astype(jnp.float32)    # (1, 4H)
    return w0, w1, whh, b


if __name__ == "__main__":
    # Small shapes consistent with the module (real module: F0=F1=H=1024).
    T, B, F0, F1, H = 8, 8, 128, 128, 128

    key = jax.random.PRNGKey(0)
    kp, k1, k3, k0 = jax.random.split(key, 4)

    params = make_params(kp, F0, F1, H)
    input1 = jax.random.normal(k1, (T, B, F1), jnp.float32)   # (seq, batch, feat)
    input3 = jax.random.normal(k3, (T, B, H), jnp.float32)    # residual
    input0 = jax.random.normal(k0, (T, B, F0), jnp.float32)

    out6, out1 = stage7_forward(input1, input3, input0, params)
    out6 = jax.block_until_ready(out6)
    out1 = jax.block_until_ready(out1)

    ref6, ref1 = stage7_reference(input1, input3, input0, params)
    # bf16 matmul inputs + bf16 gates intermediate + approx-reciprocal sigmoid
    # vs pure-f32 reference.
    np.testing.assert_allclose(np.asarray(out6), np.asarray(ref6),
                               rtol=3e-2, atol=3e-2)
    np.testing.assert_allclose(np.asarray(out1), np.asarray(ref1))

    print("KERNEL_OK")
</pallas_src>

<mosaic_0001>
module attributes {stable_mosaic.version = 11 : i64} {
  func.func @_input_proj_kernel(%arg0: i32, %arg1: memref<64x128xf32, #tpu.memory_space<vmem>>, %arg2: memref<64x128xf32, #tpu.memory_space<vmem>>, %arg3: memref<1x512xf32, #tpu.memory_space<vmem>>, %arg4: memref<128x512xbf16, #tpu.memory_space<vmem>>, %arg5: memref<128x512xbf16, #tpu.memory_space<vmem>>, %arg6: memref<64x512xbf16, #tpu.memory_space<vmem>>) attributes {dimension_semantics = [#tpu.dimension_semantics<parallel>], iteration_bounds = array<i64: 1>, scalar_prefetch = 0 : i64, scratch_operands = 0 : i64, tpu.core_type = #tpu.core_type<tc>, window_params = [{transform_indices = @transform_0, window_bounds = array<i64: 64, 128>}, {transform_indices = @transform_1, window_bounds = array<i64: 64, 128>}, {pipeline_mode = #tpu.pipeline_mode<synchronous>, transform_indices = @transform_2, window_bounds = array<i64: 1, 512>}, {pipeline_mode = #tpu.pipeline_mode<synchronous>, transform_indices = @transform_3, window_bounds = array<i64: 128, 512>}, {pipeline_mode = #tpu.pipeline_mode<synchronous>, transform_indices = @transform_4, window_bounds = array<i64: 128, 512>}, {transform_indices = @transform_5, window_bounds = array<i64: 64, 512>}]} {
    %c0 = arith.constant 0 : index
    %c0_0 = arith.constant 0 : index
    %0 = vector.load %arg1[%c0, %c0_0] : memref<64x128xf32, #tpu.memory_space<vmem>>, vector<64x128xf32>
    %1 = arith.truncf %0 : vector<64x128xf32> to vector<64x128xbf16>
    %c0_1 = arith.constant 0 : index
    %c0_2 = arith.constant 0 : index
    %2 = vector.load %arg2[%c0_1, %c0_2] : memref<64x128xf32, #tpu.memory_space<vmem>>, vector<64x128xf32>
    %3 = arith.truncf %2 : vector<64x128xf32> to vector<64x128xbf16>
    %c0_3 = arith.constant 0 : index
    %c0_4 = arith.constant 0 : index
    %4 = vector.load %arg4[%c0_3, %c0_4] : memref<128x512xbf16, #tpu.memory_space<vmem>>, vector<128x512xbf16>
    %cst = arith.constant dense<0.000000e+00> : vector<64x512xf32>
    %5 = tpu.matmul %1, %4, %cst {dimension_numbers = #tpu.dot_dimension_numbers<[1], [0], [0], [1], [0, 0, 1, 1], [], []>} : vector<64x128xbf16>, vector<128x512xbf16>, vector<64x512xf32> -> vector<64x512xf32>
    %c0_5 = arith.constant 0 : index
    %c0_6 = arith.constant 0 : index
    %6 = vector.load %arg5[%c0_5, %c0_6] : memref<128x512xbf16, #tpu.memory_space<vmem>>, vector<128x512xbf16>
    %cst_7 = arith.constant dense<0.000000e+00> : vector<64x512xf32>
    %7 = tpu.matmul %3, %6, %cst_7 {dimension_numbers = #tpu.dot_dimension_numbers<[1], [0], [0], [1], [0, 0, 1, 1], [], []>} : vector<64x128xbf16>, vector<128x512xbf16>, vector<64x512xf32> -> vector<64x512xf32>
    %8 = arith.addf %5, %7 : vector<64x512xf32>
    %c0_8 = arith.constant 0 : index
    %c0_9 = arith.constant 0 : index
    %9 = vector.load %arg3[%c0_8, %c0_9] : memref<1x512xf32, #tpu.memory_space<vmem>>, vector<1x512xf32>
    %10 = vector.broadcast %9 : vector<1x512xf32> to vector<64x512xf32>
    %11 = arith.addf %8, %10 : vector<64x512xf32>
    %12 = arith.truncf %11 : vector<64x512xf32> to vector<64x512xbf16>
    %c0_10 = arith.constant 0 : index
    %c0_11 = arith.constant 0 : index
    %13 = vector.load %arg6[%c0_10, %c0_11] : memref<64x512xbf16, #tpu.memory_space<vmem>>, vector<64x512xbf16>
    tpu.vector_store %arg6[%c0_10, %c0_11], %12 {strides = array<i32>} : memref<64x512xbf16, #tpu.memory_space<vmem>>, vector<64x512xbf16>,
    return
  }
  func.func @transform_0(%arg0: i32) -> (i32, i32) {
    %c0_i32 = arith.constant 0 : i32
    %c0_i32_0 = arith.constant 0 : i32
    return %arg0, %c0_i32 : i32, i32
  }
  func.func @transform_1(%arg0: i32) -> (i32, i32) {
    %c0_i32 = arith.constant 0 : i32
    %c0_i32_0 = arith.constant 0 : i32
    return %arg0, %c0_i32 : i32, i32
  }
  func.func @transform_2(%arg0: i32) -> (i32, i32) {
    %c0_i32 = arith.constant 0 : i32
    %c0_i32_0 = arith.constant 0 : i32
    %c0_i32_1 = arith.constant 0 : i32
    return %c0_i32, %c0_i32_0 : i32, i32
  }
  func.func @transform_3(%arg0: i32) -> (i32, i32) {
    %c0_i32 = arith.constant 0 : i32
    %c0_i32_0 = arith.constant 0 : i32
    %c0_i32_1 = arith.constant 0 : i32
    return %c0_i32, %c0_i32_0 : i32, i32
  }
  func.func @transform_4(%arg0: i32) -> (i32, i32) {
    %c0_i32 = arith.constant 0 : i32
    %c0_i32_0 = arith.constant 0 : i32
    %c0_i32_1 = arith.constant 0 : i32
    return %c0_i32, %c0_i32_0 : i32, i32
  }
  func.func @transform_5(%arg0: i32) -> (i32, i32) {
    %c0_i32 = arith.constant 0 : i32
    %c0_i32_0 = arith.constant 0 : i32
    return %arg0, %c0_i32 : i32, i32
  }
}

module attributes {stable_mosaic.version = 11 : i64} {
  func.func @_input_proj_kernel(%arg0: i32, %arg1: memref<64x128xf32, #tpu.memory_space<vmem>>, %arg2: memref<64x128xf32, #tpu.memory_space<vmem>>, %arg3: memref<1x512xf32, #tpu.memory_space<vmem>>, %arg4: memref<128x512xbf16, #tpu.memory_space<vmem>>, %arg5: memref<128x512xbf16, #tpu.memory_space<vmem>>, %arg6: memref<64x512xbf16, #tpu.memory_space<vmem>>) attributes {dimension_semantics = [#tpu.dimension_semantics<parallel>], iteration_bounds = array<i64: 1>, scalar_prefetch = 0 : i64, scratch_operands = 0 : i64, tpu.core_type = #tpu.core_type<tc>, window_params = [{transform_indices = @transform_0, window_bounds = array<i64: 64, 128>}, {transform_indices = @transform_1, window_bounds = array<i64: 64, 128>}, {pipeline_mode = #tpu.pipeline_mode<synchronous>, transform_indices = @transform_2, window_bounds = array<i64: 1, 512>}, {pipeline_mode = #tpu.pipeline_mode<synchronous>, transform_indices = @transform_3, window_bounds = array<i64: 128, 512>}, {pipeline_mode = #tpu.pipeline_mode<synchronous>, transform_indices = @transform_4, window_bounds = array<i64: 128, 512>}, {transform_indices = @transform_5, window_bounds = array<i64: 64, 512>}]} {
    %c0 = arith.constant 0 : index
    %c0_0 = arith.constant 0 : index
    %0 = vector.load %arg1[%c0, %c0_0] : memref<64x128xf32, #tpu.memory_space<vmem>>, vector<64x128xf32>
    %1 = arith.truncf %0 : vector<64x128xf32> to vector<64x128xbf16>
    %c0_1 = arith.constant 0 : index
    %c0_2 = arith.constant 0 : index
    %2 = vector.load %arg2[%c0_1, %c0_2] : memref<64x128xf32, #tpu.memory_space<vmem>>, vector<64x128xf32>
    %3 = arith.truncf %2 : vector<64x128xf32> to vector<64x128xbf16>
    %c0_3 = arith.constant 0 : index
    %c0_4 = arith.constant 0 : index
    %4 = vector.load %arg4[%c0_3, %c0_4] : memref<128x512xbf16, #tpu.memory_space<vmem>>, vector<128x512xbf16>
    %cst = arith.constant dense<0.000000e+00> : vector<64x512xf32>
    %5 = tpu.matmul %1, %4, %cst {dimension_numbers = #tpu.dot_dimension_numbers<[1], [0], [0], [1], [0, 0, 1, 1], [], []>} : vector<64x128xbf16>, vector<128x512xbf16>, vector<64x512xf32> -> vector<64x512xf32>
    %c0_5 = arith.constant 0 : index
    %c0_6 = arith.constant 0 : index
    %6 = vector.load %arg5[%c0_5, %c0_6] : memref<128x512xbf16, #tpu.memory_space<vmem>>, vector<128x512xbf16>
    %cst_7 = arith.constant dense<0.000000e+00> : vector<64x512xf32>
    %7 = tpu.matmul %3, %6, %cst_7 {dimension_numbers = #tpu.dot_dimension_numbers<[1], [0], [0], [1], [0, 0, 1, 1], [], []>} : vector<64x128xbf16>, vector<128x512xbf16>, vector<64x512xf32> -> vector<64x512xf32>
    %8 = arith.addf %5, %7 : vector<64x512xf32>
    %c0_8 = arith.constant 0 : index
    %c0_9 = arith.constant 0 : index
    %9 = vector.load %arg3[%c0_8, %c0_9] : memref<1x512xf32, #tpu.memory_space<vmem>>, vector<1x512xf32>
    %10 = vector.broadcast %9 : vector<1x512xf32> to vector<64x512xf32>
    %11 = arith.addf %8, %10 : vector<64x512xf32>
    %12 = arith.truncf %11 : vector<64x512xf32> to vector<64x512xbf16>
    %c0_10 = arith.constant 0 : index
    %c0_11 = arith.constant 0 : index
    %13 = vector.load %arg6[%c0_10, %c0_11] : memref<64x512xbf16, #tpu.memory_space<vmem>>, vector<64x512xbf16>
    tpu.vector_store %arg6[%c0_10, %c0_11], %12 {strides = array<i32>} : memref<64x512xbf16, #tpu.memory_space<vmem>>, vector<64x512xbf16>,
    return
  }
  func.func @transform_0(%arg0: i32) -> (i32, i32) {
    %c0_i32 = arith.constant 0 : i32
    %c0_i32_0 = arith.constant 0 : i32
    return %arg0, %c0_i32 : i32, i32
  }
  func.func @transform_1(%arg0: i32) -> (i32, i32) {
    %c0_i32 = arith.constant 0 : i32
    %c0_i32_0 = arith.constant 0 : i32
    return %arg0, %c0_i32 : i32, i32
  }
  func.func @transform_2(%arg0: i32) -> (i32, i32) {
    %c0_i32 = arith.constant 0 : i32
    %c0_i32_0 = arith.constant 0 : i32
    %c0_i32_1 = arith.constant 0 : i32
    return %c0_i32, %c0_i32_0 : i32, i32
  }
  func.func @transform_3(%arg0: i32) -> (i32, i32) {
    %c0_i32 = arith.constant 0 : i32
    %c0_i32_0 = arith.constant 0 : i32
    %c0_i32_1 = arith.constant 0 : i32
    return %c0_i32, %c0_i32_0 : i32, i32
  }
  func.func @transform_4(%arg0: i32) -> (i32, i32) {
    %c0_i32 = arith.constant 0 : i32
    %c0_i32_0 = arith.constant 0 : i32
    %c0_i32_1 = arith.constant 0 : i32
    return %c0_i32, %c0_i32_0 : i32, i32
  }
  func.func @transform_5(%arg0: i32) -> (i32, i32) {
    %c0_i32 = arith.constant 0 : i32
    %c0_i32_0 = arith.constant 0 : i32
    return %arg0, %c0_i32 : i32, i32
  }
}

</mosaic_0001>

<llo_original>
// kernel: tpu_custom_call.1
$region0: #{tpu_custom_call.1}
  #allocation0 [shape = 'u32[]', space=smem, size = 0x4, offset = 0x4, fixed_abs, tag = 'smem constant byte address 0x4 - core index']
  #allocation1 [shape = 'u32[72,128]{1,0:T(1,128)}', space=vmem, size = 0x9000, scoped, tag = 'internal scratch']
  %s0 = inlined_call_operand.hbm [shape: f32[64,128], index: 0, kind: input, shape index: {}]
  %s1 = inlined_call_operand.hbm [shape: f32[64,128], index: 1, kind: input, shape index: {}]
  %s2 = inlined_call_operand.hbm [shape: f32[1,512], index: 2, kind: input, shape index: {}]
  %s3 = inlined_call_operand.hbm [shape: bf16[128,512], index: 3, kind: input, shape index: {}]
  %s4 = inlined_call_operand.hbm [shape: bf16[128,512], index: 4, kind: input, shape index: {}]
  %s5 = inlined_call_operand.hbm [shape: bf16[64,512], index: 5, kind: output, shape index: {}]
  %s6 = sld [smem:[#allocation0]]
  $region50: #{tpu_custom_call.1} parent=0
    _
  %s8 = ssub.s32 1, %s6
  %s9 = scalar_select 0, %s8, %s6
  $region1: #{tpu_custom_call.1} parent=0
    #allocation2 [shape = 'u8[32768]{0}', space=vmem, size = 0x8000, scoped, tag = 'input window, operand 0, single buffered']
    #allocation3 [shape = 's32[1]{0}', space=sflag, size = 0x4, scoped, tag = 'scoped memory for tpu_custom_call.1']
    #allocation4 [shape = 's32[1]{0}', space=sflag, size = 0x4, scoped, tag = 'scoped memory for tpu_custom_call.1']
    #allocation5 [shape = 'u8[32768]{0}', space=vmem, size = 0x8000, scoped, tag = 'input window, operand 1, single buffered']
    #allocation6 [shape = 's32[1]{0}', space=sflag, size = 0x4, scoped, tag = 'scoped memory for tpu_custom_call.1']
    #allocation7 [shape = 'u8[2048]{0}', space=vmem, size = 0x800, scoped, tag = 'input window, operand 2, single buffered']
    #allocation8 [shape = 'u8[131072]{0}', space=vmem, size = 0x20000, scoped, tag = 'input window, operand 3, single buffered']
    #allocation9 [shape = 's32[1]{0}', space=sflag, size = 0x4, scoped, tag = 'scoped memory for tpu_custom_call.1']
    #allocation10 [shape = 'u8[131072]{0}', space=vmem, size = 0x20000, scoped, tag = 'input window, operand 4, single buffered']
    #allocation11 [shape = 'u8[65536]{0}', space=vmem, size = 0x10000, scoped, tag = 'output window, operand 0, single buffered']
    %10 = vsyncpa [#allocation3], 0
    %11 = vsyncpa [#allocation6], 0
    %12 = vsyncpa [#allocation9], 0
    %13 = vsyncpa [#allocation4], 0
    // Predicated region
    $region2: #{tpu_custom_call.1} parent=1 // pred_check
      _
    $region3: #{tpu_custom_call.1} parent=1 // pred_check_branch
      %15 = sbr.rel (0) target = $region5
    $region4: #{tpu_custom_call.1} parent=1 // pred_region
      %17 = vsyncadd [#allocation3], 0
      %s18 = sshll.u32 %s0, 4
      %s19 = int_to_ptr.hbm [resolvable:$true] %s18
      %s20 = sshll.u32 [#allocation2], 4
      %s21 = int_to_ptr.vmem [resolvable:$true] %s20
      %26 = dma.hbm_to_vmem [thread:$0]  %s19, 1024, %s21, [#allocation3], 128, 128, 8
    $region5: #{tpu_custom_call.1} parent=1 // pred_fallthru
      _
    // Predicated region
    $region6: #{tpu_custom_call.1} parent=1 // pred_check
      _
    $region7: #{tpu_custom_call.1} parent=1 // pred_check_branch
      %28 = sbr.rel (0) target = $region9
    $region8: #{tpu_custom_call.1} parent=1 // pred_region
      %30 = vsyncadd [#allocation6], 0
      %s31 = sshll.u32 %s1, 4
      %s32 = int_to_ptr.hbm [resolvable:$true] %s31
      %s33 = sshll.u32 [#allocation5], 4
      %s34 = int_to_ptr.vmem [resolvable:$true] %s33
      %39 = dma.hbm_to_vmem [thread:$0]  %s32, 1024, %s34, [#allocation6], 128, 128, 8
    $region9: #{tpu_custom_call.1} parent=1 // pred_fallthru
      _
    // Predicated region
    $region10: #{tpu_custom_call.1} parent=1 // pred_check
      _
    $region11: #{tpu_custom_call.1} parent=1 // pred_check_branch
      %41 = sbr.rel (0) target = $region13
    $region12: #{tpu_custom_call.1} parent=1 // pred_region
      %43 = vsyncadd [#allocation6], 0
      %s45 = sshll.u32 %s2, 4
      %s46 = int_to_ptr.hbm [resolvable:$true] %s45
      %s47 = sshll.u32 [#allocation7], 4
      %s48 = int_to_ptr.vmem [resolvable:$true] %s47
      %50 = dma.hbm_to_vmem [thread:$0]  %s46, 64, %s48, [#allocation6]
    $region13: #{tpu_custom_call.1} parent=1 // pred_fallthru
      _
    // Predicated region
    $region14: #{tpu_custom_call.1} parent=1 // pred_check
      _
    $region15: #{tpu_custom_call.1} parent=1 // pred_check_branch
      %52 = sbr.rel (0) target = $region17
    $region16: #{tpu_custom_call.1} parent=1 // pred_region
      %54 = vsyncadd [#allocation9], 0
      %s55 = sshll.u32 %s3, 4
      %s56 = int_to_ptr.hbm [resolvable:$true] %s55
      %s57 = sshll.u32 [#allocation8], 4
      %s58 = int_to_ptr.vmem [resolvable:$true] %s57
      %63 = dma.hbm_to_vmem [thread:$0]  %s56, 4096, %s58, [#allocation9], 256, 256, 16
    $region17: #{tpu_custom_call.1} parent=1 // pred_fallthru
      _
    // Predicated region
    $region18: #{tpu_custom_call.1} parent=1 // pred_check
      _
    $region19: #{tpu_custom_call.1} parent=1 // pred_check_branch
      %65 = sbr.rel (0) target = $region21
    $region20: #{tpu_custom_call.1} parent=1 // pred_region
      %67 = vsyncadd [#allocation9], 0
      %s68 = sshll.u32 %s4, 4
      %s69 = int_to_ptr.hbm [resolvable:$true] %s68
      %s70 = sshll.u32 [#allocation10], 4
      %s71 = int_to_ptr.vmem [resolvable:$true] %s70
      %76 = dma.hbm_to_vmem [thread:$0]  %s69, 4096, %s71, [#allocation9], 256, 256, 16
    $region21: #{tpu_custom_call.1} parent=1 // pred_fallthru
      _
    // Predicated region
    $region22: #{tpu_custom_call.1} parent=1 // pred_check
      _
    $region23: #{tpu_custom_call.1} parent=1 // pred_check_branch
      %78 = sbr.rel (0) target = $region25
    $region24: #{tpu_custom_call.1} parent=1 // pred_region
      %80 = dma.done [#allocation3], 1024
    $region25: #{tpu_custom_call.1} parent=1 // pred_fallthru
      _
    // Predicated region
    $region26: #{tpu_custom_call.1} parent=1 // pred_check
      _
    $region27: #{tpu_custom_call.1} parent=1 // pred_check_branch
      %82 = sbr.rel (0) target = $region29
    $region28: #{tpu_custom_call.1} parent=1 // pred_region
      %84 = dma.done [#allocation6], 1024
    $region29: #{tpu_custom_call.1} parent=1 // pred_fallthru
      _
    // Predicated region
    $region30: #{tpu_custom_call.1} parent=1 // pred_check
      _
    $region31: #{tpu_custom_call.1} parent=1 // pred_check_branch
      %86 = sbr.rel (0) target = $region33
    $region32: #{tpu_custom_call.1} parent=1 // pred_region
      %88 = dma.done [#allocation6], 64
    $region33: #{tpu_custom_call.1} parent=1 // pred_fallthru
      _
    // Predicated region
    $region34: #{tpu_custom_call.1} parent=1 // pred_check
      _
    $region35: #{tpu_custom_call.1} parent=1 // pred_check_branch
      %90 = sbr.rel (0) target = $region37
    $region36: #{tpu_custom_call.1} parent=1 // pred_region
      %92 = dma.done [#allocation9], 4096
    $region37: #{tpu_custom_call.1} parent=1 // pred_fallthru
      _
    // Predicated region
    $region38: #{tpu_custom_call.1} parent=1 // pred_check
      _
    $region39: #{tpu_custom_call.1} parent=1 // pred_check_branch
      %94 = sbr.rel (0) target = $region41
    $region40: #{tpu_custom_call.1} parent=1 // pred_region
      %96 = dma.done [#allocation9], 4096
    $region41: #{tpu_custom_call.1} parent=1 // pred_fallthru
      _
    %v97 = vld [vmem:[#allocation2] sm:$0xff]
    %v98 = vld [vmem:[#allocation2 + $0x8] sm:$0xff]
    %v99 = vld [vmem:[#allocation2 + $0x10] sm:$0xff]
    %v100 = vld [vmem:[#allocation2 + $0x18] sm:$0xff]
    %v101 = vld [vmem:[#allocation2 + $0x20] sm:$0xff]
    %v102 = vld [vmem:[#allocation2 + $0x28] sm:$0xff]
    %v103 = vld [vmem:[#allocation2 + $0x30] sm:$0xff]
    %v104 = vld [vmem:[#allocation2 + $0x38] sm:$0xff]
    %v105 = vpack.c.bf16 %v98, %v97
    %v106 = vpack.c.bf16 %v100, %v99
    %v107 = vpack.c.bf16 %v102, %v101
    %v108 = vpack.c.bf16 %v104, %v103
    %v109 = vld [vmem:[#allocation5] sm:$0xff]
    %v110 = vld [vmem:[#allocation5 + $0x8] sm:$0xff]
    %v111 = vld [vmem:[#allocation5 + $0x10] sm:$0xff]
    %v112 = vld [vmem:[#allocation5 + $0x18] sm:$0xff]
    %v113 = vld [vmem:[#allocation5 + $0x20] sm:$0xff]
    %v114 = vld [vmem:[#allocation5 + $0x28] sm:$0xff]
    %v115 = vld [vmem:[#allocation5 + $0x30] sm:$0xff]
    %v116 = vld [vmem:[#allocation5 + $0x38] sm:$0xff]
    %v117 = vpack.c.bf16 %v110, %v109
    %v118 = vpack.c.bf16 %v112, %v111
    %v119 = vpack.c.bf16 %v114, %v113
    %v120 = vpack.c.bf16 %v116, %v115
    %v121 = vld [vmem:[#allocation8] sm:$0xff]
    %v122 = vld [vmem:[#allocation8 + $0x8] sm:$0xff]
    %v123 = vld [vmem:[#allocation8 + $0x10] sm:$0xff]
    %v124 = vld [vmem:[#allocation8 + $0x18] sm:$0xff]
    %v125 = vld [vmem:[#allocation8 + $0x20] sm:$0xff]
    %v126 = vld [vmem:[#allocation8 + $0x28] sm:$0xff]
    %v127 = vld [vmem:[#allocation8 + $0x30] sm:$0xff]
    %v128 = vld [vmem:[#allocation8 + $0x38] sm:$0xff]
    %v129 = vld [vmem:[#allocation8 + $0x40] sm:$0xff]
    %v130 = vld [vmem:[#allocation8 + $0x48] sm:$0xff]
    %v131 = vld [vmem:[#allocation8 + $0x50] sm:$0xff]
    %v132 = vld [vmem:[#allocation8 + $0x58] sm:$0xff]
    %v133 = vld [vmem:[#allocation8 + $0x60] sm:$0xff]
    %v134 = vld [vmem:[#allocation8 + $0x68] sm:$0xff]
    %v135 = vld [vmem:[#allocation8 + $0x70] sm:$0xff]
    %v136 = vld [vmem:[#allocation8 + $0x78] sm:$0xff]
    %v137 = vld [vmem:[#allocation8 + $0x80] sm:$0xff]
    %v138 = vld [vmem:[#allocation8 + $0x88] sm:$0xff]
    %v139 = vld [vmem:[#allocation8 + $0x90] sm:$0xff]
    %v140 = vld [vmem:[#allocation8 + $0x98] sm:$0xff]
    %v141 = vld [vmem:[#allocation8 + $0xa0] sm:$0xff]
    %v142 = vld [vmem:[#allocation8 + $0xa8] sm:$0xff]
    %v143 = vld [vmem:[#allocation8 + $0xb0] sm:$0xff]
    %v144 = vld [vmem:[#allocation8 + $0xb8] sm:$0xff]
    %v145 = vld [vmem:[#allocation8 + $0xc0] sm:$0xff]
    %v146 = vld [vmem:[#allocation8 + $0xc8] sm:$0xff]
    %v147 = vld [vmem:[#allocation8 + $0xd0] sm:$0xff]
    %v148 = vld [vmem:[#allocation8 + $0xd8] sm:$0xff]
    %v149 = vld [vmem:[#allocation8 + $0xe0] sm:$0xff]
    %v150 = vld [vmem:[#allocation8 + $0xe8] sm:$0xff]
    %v151 = vld [vmem:[#allocation8 + $0xf0] sm:$0xff]
    %v152 = vld [vmem:[#allocation8 + $0xf8] sm:$0xff]
    %v153 = vld [vmem:[#allocation10] sm:$0xff]
    %v154 = vld [vmem:[#allocation10 + $0x8] sm:$0xff]
    %v155 = vld [vmem:[#allocation10 + $0x10] sm:$0xff]
    %v156 = vld [vmem:[#allocation10 + $0x18] sm:$0xff]
    %v157 = vld [vmem:[#allocation10 + $0x20] sm:$0xff]
    %v158 = vld [vmem:[#allocation10 + $0x28] sm:$0xff]
    %v159 = vld [vmem:[#allocation10 + $0x30] sm:$0xff]
    %v160 = vld [vmem:[#allocation10 + $0x38] sm:$0xff]
    %v161 = vld [vmem:[#allocation10 + $0x40] sm:$0xff]
    %v162 = vld [vmem:[#allocation10 + $0x48] sm:$0xff]
    %v163 = vld [vmem:[#allocation10 + $0x50] sm:$0xff]
    %v164 = vld [vmem:[#allocation10 + $0x58] sm:$0xff]
    %v165 = vld [vmem:[#allocation10 + $0x60] sm:$0xff]
    %v166 = vld [vmem:[#allocation10 + $0x68] sm:$0xff]
    %v167 = vld [vmem:[#allocation10 + $0x70] sm:$0xff]
    %v168 = vld [vmem:[#allocation10 + $0x78] sm:$0xff]
    %v169 = vld [vmem:[#allocation10 + $0x80] sm:$0xff]
    %v170 = vld [vmem:[#allocation10 + $0x88] sm:$0xff]
    %v171 = vld [vmem:[#allocation10 + $0x90] sm:$0xff]
    %v172 = vld [vmem:[#allocation10 + $0x98] sm:$0xff]
    %v173 = vld [vmem:[#allocation10 + $0xa0] sm:$0xff]
    %v174 = vld [vmem:[#allocation10 + $0xa8] sm:$0xff]
    %v175 = vld [vmem:[#allocation10 + $0xb0] sm:$0xff]
    %v176 = vld [vmem:[#allocation10 + $0xb8] sm:$0xff]
    %v177 = vld [vmem:[#allocation10 + $0xc0] sm:$0xff]
    %v178 = vld [vmem:[#allocation10 + $0xc8] sm:$0xff]
    %v179 = vld [vmem:[#allocation10 + $0xd0] sm:$0xff]
    %v180 = vld [vmem:[#allocation10 + $0xd8] sm:$0xff]
    %v181 = vld [vmem:[#allocation10 + $0xe0] sm:$0xff]
    %v182 = vld [vmem:[#allocation10 + $0xe8] sm:$0xff]
    %v183 = vld [vmem:[#allocation10 + $0xf0] sm:$0xff]
    %v184 = vld [vmem:[#allocation10 + $0xf8] sm:$0xff]
    %v217 = vunpack.c.l.b16 %v153
    %v218 = vunpack.c.h.b16 %v153
    %v219 = vunpack.c.l.b16 %v154
    %v220 = vunpack.c.h.b16 %v154
    %v221 = vunpack.c.l.b16 %v155
    %v222 = vunpack.c.h.b16 %v155
    %v223 = vunpack.c.l.b16 %v156
    %v224 = vunpack.c.h.b16 %v156
    %v225 = vunpack.c.l.b16 %v157
    %v226 = vunpack.c.h.b16 %v157
    %v227 = vunpack.c.l.b16 %v158
    %v228 = vunpack.c.h.b16 %v158
    %v229 = vunpack.c.l.b16 %v159
    %v230 = vunpack.c.h.b16 %v159
    %v231 = vunpack.c.l.b16 %v160
    %v232 = vunpack.c.h.b16 %v160
    %v233 = vunpack.c.l.b16 %v161
    %v234 = vunpack.c.h.b16 %v161
    %v235 = vunpack.c.l.b16 %v162
    %v236 = vunpack.c.h.b16 %v162
    %v237 = vunpack.c.l.b16 %v163
    %v238 = vunpack.c.h.b16 %v163
    %v239 = vunpack.c.l.b16 %v164
    %v240 = vunpack.c.h.b16 %v164
    %v241 = vunpack.c.l.b16 %v165
    %v242 = vunpack.c.h.b16 %v165
    %v243 = vunpack.c.l.b16 %v166
    %v244 = vunpack.c.h.b16 %v166
    %v245 = vunpack.c.l.b16 %v167
    %v246 = vunpack.c.h.b16 %v167
    %v247 = vunpack.c.l.b16 %v168
    %v248 = vunpack.c.h.b16 %v168
    %v249 = vunpack.c.l.b16 %v169
    %v250 = vunpack.c.h.b16 %v169
    %v251 = vunpack.c.l.b16 %v170
    %v252 = vunpack.c.h.b16 %v170
    %v253 = vunpack.c.l.b16 %v171
    %v254 = vunpack.c.h.b16 %v171
    %v255 = vunpack.c.l.b16 %v172
    %v256 = vunpack.c.h.b16 %v172
    %v257 = vunpack.c.l.b16 %v173
    %v258 = vunpack.c.h.b16 %v173
    %v259 = vunpack.c.l.b16 %v174
    %v260 = vunpack.c.h.b16 %v174
    %v261 = vunpack.c.l.b16 %v175
    %v262 = vunpack.c.h.b16 %v175
    %v263 = vunpack.c.l.b16 %v176
    %v264 = vunpack.c.h.b16 %v176
    %v265 = vunpack.c.l.b16 %v177
    %v266 = vunpack.c.h.b16 %v177
    %v267 = vunpack.c.l.b16 %v178
    %v268 = vunpack.c.h.b16 %v178
    %v269 = vunpack.c.l.b16 %v179
    %v270 = vunpack.c.h.b16 %v179
    %v271 = vunpack.c.l.b16 %v180
    %v272 = vunpack.c.h.b16 %v180
    %v273 = vunpack.c.l.b16 %v181
    %v274 = vunpack.c.h.b16 %v181
    %v275 = vunpack.c.l.b16 %v182
    %v276 = vunpack.c.h.b16 %v182
    %v277 = vunpack.c.l.b16 %v183
    %v278 = vunpack.c.h.b16 %v183
    %v279 = vunpack.c.l.b16 %v184
    %v280 = vunpack.c.h.b16 %v184
    %v281 = vpack.c.b16 %v221, %v217
    %v282 = vpack.c.b16 %v222, %v218
    %v283 = vpack.c.b16 %v223, %v219
    %v284 = vpack.c.b16 %v224, %v220
    %v285 = vpack.c.b16 %v229, %v225
    %v286 = vpack.c.b16 %v230, %v226
    %v287 = vpack.c.b16 %v231, %v227
    %v288 = vpack.c.b16 %v232, %v228
    %v289 = vpack.c.b16 %v237, %v233
    %v290 = vpack.c.b16 %v238, %v234
    %v291 = vpack.c.b16 %v239, %v235
    %v292 = vpack.c.b16 %v240, %v236
    %v293 = vpack.c.b16 %v245, %v241
    %v294 = vpack.c.b16 %v246, %v242
    %v295 = vpack.c.b16 %v247, %v243
    %v296 = vpack.c.b16 %v248, %v244
    %v297 = vpack.c.b16 %v253, %v249
    %v298 = vpack.c.b16 %v254, %v250
    %v299 = vpack.c.b16 %v255, %v251
    %v300 = vpack.c.b16 %v256, %v252
    %v301 = vpack.c.b16 %v261, %v257
    %v302 = vpack.c.b16 %v262, %v258
    %v303 = vpack.c.b16 %v263, %v259
    %v304 = vpack.c.b16 %v264, %v260
    %v305 = vpack.c.b16 %v269, %v265
    %v306 = vpack.c.b16 %v270, %v266
    %v307 = vpack.c.b16 %v271, %v267
    %v308 = vpack.c.b16 %v272, %v268
    %v309 = vpack.c.b16 %v277, %v273
    %v310 = vpack.c.b16 %v278, %v274
    %v311 = vpack.c.b16 %v279, %v275
    %v312 = vpack.c.b16 %v280, %v276
    %345 = vmatpush.bf16.msra.mxu0 %v309
    %346 = vmatpush.bf16.msra.mxu0 %v305
    %347 = vmatpush.bf16.msra.mxu0 %v301
    %348 = vmatpush.bf16.msra.mxu0 %v297
    %349 = vmatpush.bf16.msra.mxu0 %v293
    %350 = vmatpush.bf16.msra.mxu0 %v289
    %351 = vmatpush.bf16.msra.mxu0 %v285
    %352 = vmatpush.bf16.msra.mxu0 %v281
    %353 = vmatmul.bf16.gmra.mxu0 %v117
    %v354 = vpop.f32.mrf.mxu0
    %v355 = vadd.f32 0.0, %v354
    %v356 = vpop.f32.mrf.mxu0
    %v357 = vadd.f32 0.0, %v356
    %358 = vmatmul.bf16.gmra.mxu0 %v118
    %v359 = vpop.f32.mrf.mxu0
    %v360 = vadd.f32 0.0, %v359
    %v361 = vpop.f32.mrf.mxu0
    %v362 = vadd.f32 0.0, %v361
    %363 = vmatmul.bf16.gmra.mxu0 %v119
    %v364 = vpop.f32.mrf.mxu0
    %v365 = vadd.f32 0.0, %v364
    %v366 = vpop.f32.mrf.mxu0
    %v367 = vadd.f32 0.0, %v366
    %368 = vmatmul.bf16.gmra.mxu0 %v120
    %v369 = vpop.f32.mrf.mxu0
    %v370 = vadd.f32 0.0, %v369
    %v371 = vpop.f32.mrf.mxu0
    %v372 = vadd.f32 0.0, %v371
    %373 = vdwg.mxu0
    %374 = vmatpush.bf16.msra.mxu0 %v310
    %375 = vmatpush.bf16.msra.mxu0 %v306
    %376 = vmatpush.bf16.msra.mxu0 %v302
    %377 = vmatpush.bf16.msra.mxu0 %v298
    %378 = vmatpush.bf16.msra.mxu0 %v294
    %379 = vmatpush.bf16.msra.mxu0 %v290
    %380 = vmatpush.bf16.msra.mxu0 %v286
    %381 = vmatpush.bf16.msra.mxu0 %v282
    %382 = vmatmul.bf16.gmra.mxu0 %v117
    %v383 = vpop.f32.mrf.mxu0
    %v384 = vadd.f32 0.0, %v383
    %v385 = vpop.f32.mrf.mxu0
    %v386 = vadd.f32 0.0, %v385
    %387 = vmatmul.bf16.gmra.mxu0 %v118
    %v388 = vpop.f32.mrf.mxu0
    %v389 = vadd.f32 0.0, %v388
    %v390 = vpop.f32.mrf.mxu0
    %v391 = vadd.f32 0.0, %v390
    %392 = vmatmul.bf16.gmra.mxu0 %v119
    %v393 = vpop.f32.mrf.mxu0
    %v394 = vadd.f32 0.0, %v393
    %v395 = vpop.f32.mrf.mxu0
    %v396 = vadd.f32 0.0, %v395
    %397 = vmatmul.bf16.gmra.mxu0 %v120
    %v398 = vpop.f32.mrf.mxu0
    %v399 = vadd.f32 0.0, %v398
    %v400 = vpop.f32.mrf.mxu0
    %v401 = vadd.f32 0.0, %v400
    %402 = vdwg.mxu0
    %403 = vmatpush.bf16.msra.mxu0 %v311
    %404 = vmatpush.bf16.msra.mxu0 %v307
    %405 = vmatpush.bf16.msra.mxu0 %v303
    %406 = vmatpush.bf16.msra.mxu0 %v299
    %407 = vmatpush.bf16.msra.mxu0 %v295
    %408 = vmatpush.bf16.msra.mxu0 %v291
    %409 = vmatpush.bf16.msra.mxu0 %v287
    %410 = vmatpush.bf16.msra.mxu0 %v283
    %411 = vmatmul.bf16.gmra.mxu0 %v117
    %v412 = vpop.f32.mrf.mxu0
    %v413 = vadd.f32 0.0, %v412
    %v414 = vpop.f32.mrf.mxu0
    %v415 = vadd.f32 0.0, %v414
    %416 = vmatmul.bf16.gmra.mxu0 %v118
    %v417 = vpop.f32.mrf.mxu0
    %v418 = vadd.f32 0.0, %v417
    %v419 = vpop.f32.mrf.mxu0
    %v420 = vadd.f32 0.0, %v419
    %421 = vmatmul.bf16.gmra.mxu0 %v119
    %v422 = vpop.f32.mrf.mxu0
    %v423 = vadd.f32 0.0, %v422
    %v424 = vpop.f32.mrf.mxu0
    %v425 = vadd.f32 0.0, %v424
    %426 = vmatmul.bf16.gmra.mxu0 %v120
    %v427 = vpop.f32.mrf.mxu0
    %v428 = vadd.f32 0.0, %v427
    %v429 = vpop.f32.mrf.mxu0
    %v430 = vadd.f32 0.0, %v429
    %431 = vdwg.mxu0
    %432 = vmatpush.bf16.msra.mxu0 %v312
    %433 = vmatpush.bf16.msra.mxu0 %v308
    %434 = vmatpush.bf16.msra.mxu0 %v304
    %435 = vmatpush.bf16.msra.mxu0 %v300
    %436 = vmatpush.bf16.msra.mxu0 %v296
    %437 = vmatpush.bf16.msra.mxu0 %v292
    %438 = vmatpush.bf16.msra.mxu0 %v288
    %439 = vmatpush.bf16.msra.mxu0 %v284
    %440 = vmatmul.bf16.gmra.mxu0 %v117
    %v441 = vpop.f32.mrf.mxu0
    %v442 = vadd.f32 0.0, %v441
    %v443 = vpop.f32.mrf.mxu0
    %v444 = vadd.f32 0.0, %v443
    %445 = vmatmul.bf16.gmra.mxu0 %v118
    %v446 = vpop.f32.mrf.mxu0
    %v447 = vadd.f32 0.0, %v446
    %v448 = vpop.f32.mrf.mxu0
    %v449 = vadd.f32 0.0, %v448
    %450 = vmatmul.bf16.gmra.mxu0 %v119
    %v451 = vpop.f32.mrf.mxu0
    %v452 = vadd.f32 0.0, %v451
    %v453 = vpop.f32.mrf.mxu0
    %v454 = vadd.f32 0.0, %v453
    %455 = vmatmul.bf16.gmra.mxu0 %v120
    %v456 = vpop.f32.mrf.mxu0
    %v457 = vadd.f32 0.0, %v456
    %v458 = vpop.f32.mrf.mxu0
    %v459 = vadd.f32 0.0, %v458
    %460 = vdwg.mxu0
    %v493 = vunpack.c.l.b16 %v121
    %v494 = vunpack.c.h.b16 %v121
    %v495 = vunpack.c.l.b16 %v122
    %v496 = vunpack.c.h.b16 %v122
    %v497 = vunpack.c.l.b16 %v123
    %v498 = vunpack.c.h.b16 %v123
    %v499 = vunpack.c.l.b16 %v124
    %v500 = vunpack.c.h.b16 %v124
    %v501 = vunpack.c.l.b16 %v125
    %v502 = vunpack.c.h.b16 %v125
    %v503 = vunpack.c.l.b16 %v126
    %v504 = vunpack.c.h.b16 %v126
    %v505 = vunpack.c.l.b16 %v127
    %v506 = vunpack.c.h.b16 %v127
    %v507 = vunpack.c.l.b16 %v128
    %v508 = vunpack.c.h.b16 %v128
    %v509 = vunpack.c.l.b16 %v129
    %v510 = vunpack.c.h.b16 %v129
    %v511 = vunpack.c.l.b16 %v130
    %v512 = vunpack.c.h.b16 %v130
    %v513 = vunpack.c.l.b16 %v131
    %v514 = vunpack.c.h.b16 %v131
    %v515 = vunpack.c.l.b16 %v132
    %v516 = vunpack.c.h.b16 %v132
    %v517 = vunpack.c.l.b16 %v133
    %v518 = vunpack.c.h.b16 %v133
    %v519 = vunpack.c.l.b16 %v134
    %v520 = vunpack.c.h.b16 %v134
    %v521 = vunpack.c.l.b16 %v135
    %v522 = vunpack.c.h.b16 %v135
    %v523 = vunpack.c.l.b16 %v136
    %v524 = vunpack.c.h.b16 %v136
    %v525 = vunpack.c.l.b16 %v137
    %v526 = vunpack.c.h.b16 %v137
    %v527 = vunpack.c.l.b16 %v138
    %v528 = vunpack.c.h.b16 %v138
    %v529 = vunpack.c.l.b16 %v139
    %v530 = vunpack.c.h.b16 %v139
    %v531 = vunpack.c.l.b16 %v140
    %v532 = vunpack.c.h.b16 %v140
    %v533 = vunpack.c.l.b16 %v141
    %v534 = vunpack.c.h.b16 %v141
    %v535 = vunpack.c.l.b16 %v142
    %v536 = vunpack.c.h.b16 %v142
    %v537 = vunpack.c.l.b16 %v143
    %v538 = vunpack.c.h.b16 %v143
    %v539 = vunpack.c.l.b16 %v144
    %v540 = vunpack.c.h.b16 %v144
    %v541 = vunpack.c.l.b16 %v145
    %v542 = vunpack.c.h.b16 %v145
    %v543 = vunpack.c.l.b16 %v146
    %v544 = vunpack.c.h.b16 %v146
    %v545 = vunpack.c.l.b16 %v147
    %v546 = vunpack.c.h.b16 %v147
    %v547 = vunpack.c.l.b16 %v148
    %v548 = vunpack.c.h.b16 %v148
    %v549 = vunpack.c.l.b16 %v149
    %v550 = vunpack.c.h.b16 %v149
    %v551 = vunpack.c.l.b16 %v150
    %v552 = vunpack.c.h.b16 %v150
    %v553 = vunpack.c.l.b16 %v151
    %v554 = vunpack.c.h.b16 %v151
    %v555 = vunpack.c.l.b16 %v152
    %v556 = vunpack.c.h.b16 %v152
    %v557 = vpack.c.b16 %v497, %v493
    %v558 = vpack.c.b16 %v498, %v494
    %v559 = vpack.c.b16 %v499, %v495
    %v560 = vpack.c.b16 %v500, %v496
    %v561 = vpack.c.b16 %v505, %v501
    %v562 = vpack.c.b16 %v506, %v502
    %v563 = vpack.c.b16 %v507, %v503
    %v564 = vpack.c.b16 %v508, %v504
    %v565 = vpack.c.b16 %v513, %v509
    %v566 = vpack.c.b16 %v514, %v510
    %v567 = vpack.c.b16 %v515, %v511
    %v568 = vpack.c.b16 %v516, %v512
    %v569 = vpack.c.b16 %v521, %v517
    %v570 = vpack.c.b16 %v522, %v518
    %v571 = vpack.c.b16 %v523, %v519
    %v572 = vpack.c.b16 %v524, %v520
    %v573 = vpack.c.b16 %v529, %v525
    %v574 = vpack.c.b16 %v530, %v526
    %v575 = vpack.c.b16 %v531, %v527
    %v576 = vpack.c.b16 %v532, %v528
    %v577 = vpack.c.b16 %v537, %v533
    %v578 = vpack.c.b16 %v538, %v534
    %v579 = vpack.c.b16 %v539, %v535
    %v580 = vpack.c.b16 %v540, %v536
    %v581 = vpack.c.b16 %v545, %v541
    %v582 = vpack.c.b16 %v546, %v542
    %v583 = vpack.c.b16 %v547, %v543
    %v584 = vpack.c.b16 %v548, %v544
    %v585 = vpack.c.b16 %v553, %v549
    %v586 = vpack.c.b16 %v554, %v550
    %v587 = vpack.c.b16 %v555, %v551
    %v588 = vpack.c.b16 %v556, %v552
    %621 = vmatpush.bf16.msra.mxu0 %v585
    %622 = vmatpush.bf16.msra.mxu0 %v581
    %623 = vmatpush.bf16.msra.mxu0 %v577
    %624 = vmatpush.bf16.msra.mxu0 %v573
    %625 = vmatpush.bf16.msra.mxu0 %v569
    %626 = vmatpush.bf16.msra.mxu0 %v565
    %627 = vmatpush.bf16.msra.mxu0 %v561
    %628 = vmatpush.bf16.msra.mxu0 %v557
    %629 = vmatmul.bf16.gmra.mxu0 %v105
    %v630 = vpop.f32.mrf.mxu0
    %v631 = vadd.f32 %v355, %v630
    %v632 = vpop.f32.mrf.mxu0
    %v633 = vadd.f32 %v357, %v632
    %634 = vmatmul.bf16.gmra.mxu0 %v106
    %v635 = vpop.f32.mrf.mxu0
    %v636 = vadd.f32 %v360, %v635
    %v637 = vpop.f32.mrf.mxu0
    %v638 = vadd.f32 %v362, %v637
    %639 = vmatmul.bf16.gmra.mxu0 %v107
    %v640 = vpop.f32.mrf.mxu0
    %v641 = vadd.f32 %v365, %v640
    %v642 = vpop.f32.mrf.mxu0
    %v643 = vadd.f32 %v367, %v642
    %644 = vmatmul.bf16.gmra.mxu0 %v108
    %v645 = vpop.f32.mrf.mxu0
    %v646 = vadd.f32 %v370, %v645
    %v647 = vpop.f32.mrf.mxu0
    %v648 = vadd.f32 %v372, %v647
    %649 = vdwg.mxu0
    %650 = vmatpush.bf16.msra.mxu0 %v586
    %651 = vmatpush.bf16.msra.mxu0 %v582
    %652 = vmatpush.bf16.msra.mxu0 %v578
    %653 = vmatpush.bf16.msra.mxu0 %v574
    %654 = vmatpush.bf16.msra.mxu0 %v570
    %655 = vmatpush.bf16.msra.mxu0 %v566
    %656 = vmatpush.bf16.msra.mxu0 %v562
    %657 = vmatpush.bf16.msra.mxu0 %v558
    %658 = vmatmul.bf16.gmra.mxu0 %v105
    %v659 = vpop.f32.mrf.mxu0
    %v660 = vadd.f32 %v384, %v659
    %v661 = vpop.f32.mrf.mxu0
    %v662 = vadd.f32 %v386, %v661
    %663 = vmatmul.bf16.gmra.mxu0 %v106
    %v664 = vpop.f32.mrf.mxu0
    %v665 = vadd.f32 %v389, %v664
    %v666 = vpop.f32.mrf.mxu0
    %v667 = vadd.f32 %v391, %v666
    %668 = vmatmul.bf16.gmra.mxu0 %v107
    %v669 = vpop.f32.mrf.mxu0
    %v670 = vadd.f32 %v394, %v669
    %v671 = vpop.f32.mrf.mxu0
    %v672 = vadd.f32 %v396, %v671
    %673 = vmatmul.bf16.gmra.mxu0 %v108
    %v674 = vpop.f32.mrf.mxu0
    %v675 = vadd.f32 %v399, %v674
    %v676 = vpop.f32.mrf.mxu0
    %v677 = vadd.f32 %v401, %v676
    %678 = vdwg.mxu0
    %679 = vmatpush.bf16.msra.mxu0 %v587
    %680 = vmatpush.bf16.msra.mxu0 %v583
    %681 = vmatpush.bf16.msra.mxu0 %v579
    %682 = vmatpush.bf16.msra.mxu0 %v575
    %683 = vmatpush.bf16.msra.mxu0 %v571
    %684 = vmatpush.bf16.msra.mxu0 %v567
    %685 = vmatpush.bf16.msra.mxu0 %v563
    %686 = vmatpush.bf16.msra.mxu0 %v559
    %687 = vmatmul.bf16.gmra.mxu0 %v105
    %v688 = vpop.f32.mrf.mxu0
    %v689 = vadd.f32 %v413, %v688
    %v690 = vpop.f32.mrf.mxu0
    %v691 = vadd.f32 %v415, %v690
    %692 = vmatmul.bf16.gmra.mxu0 %v106
    %v693 = vpop.f32.mrf.mxu0
    %v694 = vadd.f32 %v418, %v693
    %v695 = vpop.f32.mrf.mxu0
    %v696 = vadd.f32 %v420, %v695
    %697 = vmatmul.bf16.gmra.mxu0 %v107
    %v698 = vpop.f32.mrf.mxu0
    %v699 = vadd.f32 %v423, %v698
    %v700 = vpop.f32.mrf.mxu0
    %v701 = vadd.f32 %v425, %v700
    %702 = vmatmul.bf16.gmra.mxu0 %v108
    %v703 = vpop.f32.mrf.mxu0
    %v704 = vadd.f32 %v428, %v703
    %v705 = vpop.f32.mrf.mxu0
    %v706 = vadd.f32 %v430, %v705
    %707 = vdwg.mxu0
    %708 = vmatpush.bf16.msra.mxu0 %v588
    %709 = vmatpush.bf16.msra.mxu0 %v584
    %710 = vmatpush.bf16.msra.mxu0 %v580
    %711 = vmatpush.bf16.msra.mxu0 %v576
    %712 = vmatpush.bf16.msra.mxu0 %v572
    %713 = vmatpush.bf16.msra.mxu0 %v568
    %714 = vmatpush.bf16.msra.mxu0 %v564
    %715 = vmatpush.bf16.msra.mxu0 %v560
    %716 = vmatmul.bf16.gmra.mxu0 %v105
    %v717 = vpop.f32.mrf.mxu0
    %v718 = vadd.f32 %v442, %v717
    %v719 = vpop.f32.mrf.mxu0
    %v720 = vadd.f32 %v444, %v719
    %721 = vmatmul.bf16.gmra.mxu0 %v106
    %v722 = vpop.f32.mrf.mxu0
    %v723 = vadd.f32 %v447, %v722
    %v724 = vpop.f32.mrf.mxu0
    %v725 = vadd.f32 %v449, %v724
    %726 = vmatmul.bf16.gmra.mxu0 %v107
    %v727 = vpop.f32.mrf.mxu0
    %v728 = vadd.f32 %v452, %v727
    %v729 = vpop.f32.mrf.mxu0
    %v730 = vadd.f32 %v454, %v729
    %731 = vmatmul.bf16.gmra.mxu0 %v108
    %v732 = vpop.f32.mrf.mxu0
    %v733 = vadd.f32 %v457, %v732
    %v734 = vpop.f32.mrf.mxu0
    %v735 = vadd.f32 %v459, %v734
    %736 = vdwg.mxu0
    %v737 = vld [vmem:[#allocation7] sm:$0xf]
    %v739 = vperm.slane %v737, 0
    %v740 = vperm.slane %v737, 1
    %v741 = vperm.slane %v737, 2
    %v742 = vperm.slane %v737, 3
    %v747 = vadd.f32 %v631, %v739
    %v748 = vadd.f32 %v660, %v740
    %v749 = vadd.f32 %v689, %v741
    %v750 = vadd.f32 %v718, %v742
    %v751 = vadd.f32 %v633, %v739
    %v752 = vadd.f32 %v662, %v740
    %v753 = vadd.f32 %v691, %v741
    %v754 = vadd.f32 %v720, %v742
    %v755 = vadd.f32 %v636, %v739
    %v756 = vadd.f32 %v665, %v740
    %v757 = vadd.f32 %v694, %v741
    %v758 = vadd.f32 %v723, %v742
    %v759 = vadd.f32 %v638, %v739
    %v760 = vadd.f32 %v667, %v740
    %v761 = vadd.f32 %v696, %v741
    %v762 = vadd.f32 %v725, %v742
    %v763 = vadd.f32 %v641, %v739
    %v764 = vadd.f32 %v670, %v740
    %v765 = vadd.f32 %v699, %v741
    %v766 = vadd.f32 %v728, %v742
    %v767 = vadd.f32 %v643, %v739
    %v768 = vadd.f32 %v672, %v740
    %v769 = vadd.f32 %v701, %v741
    %v770 = vadd.f32 %v730, %v742
    %v771 = vadd.f32 %v646, %v739
    %v772 = vadd.f32 %v675, %v740
    %v773 = vadd.f32 %v704, %v741
    %v774 = vadd.f32 %v733, %v742
    %v775 = vadd.f32 %v648, %v739
    %v776 = vadd.f32 %v677, %v740
    %v777 = vadd.f32 %v706, %v741
    %v778 = vadd.f32 %v735, %v742
    %v779 = vpack.c.bf16 %v748, %v747
    %v780 = vpack.c.bf16 %v750, %v749
    %v781 = vpack.c.bf16 %v752, %v751
    %v782 = vpack.c.bf16 %v754, %v753
    %v783 = vpack.c.bf16 %v756, %v755
    %v784 = vpack.c.bf16 %v758, %v757
    %v785 = vpack.c.bf16 %v760, %v759
    %v786 = vpack.c.bf16 %v762, %v761
    %v787 = vpack.c.bf16 %v764, %v763
    %v788 = vpack.c.bf16 %v766, %v765
    %v789 = vpack.c.bf16 %v768, %v767
    %v790 = vpack.c.bf16 %v770, %v769
    %v791 = vpack.c.bf16 %v772, %v771
    %v792 = vpack.c.bf16 %v774, %v773
    %v793 = vpack.c.bf16 %v776, %v775
    %v794 = vpack.c.bf16 %v778, %v777
    %795 = vst [vmem:[#allocation11] sm:$0xff] %v779
    %796 = vst [vmem:[#allocation11 + $0x8] sm:$0xff] %v780
    %797 = vst [vmem:[#allocation11 + $0x10] sm:$0xff] %v781
    %798 = vst [vmem:[#allocation11 + $0x18] sm:$0xff] %v782
    %799 = vst [vmem:[#allocation11 + $0x20] sm:$0xff] %v783
    %800 = vst [vmem:[#allocation11 + $0x28] sm:$0xff] %v784
    %801 = vst [vmem:[#allocation11 + $0x30] sm:$0xff] %v785
    %802 = vst [vmem:[#allocation11 + $0x38] sm:$0xff] %v786
    %803 = vst [vmem:[#allocation11 + $0x40] sm:$0xff] %v787
    %804 = vst [vmem:[#allocation11 + $0x48] sm:$0xff] %v788
    %805 = vst [vmem:[#allocation11 + $0x50] sm:$0xff] %v789
    %806 = vst [vmem:[#allocation11 + $0x58] sm:$0xff] %v790
    %807 = vst [vmem:[#allocation11 + $0x60] sm:$0xff] %v791
    %808 = vst [vmem:[#allocation11 + $0x68] sm:$0xff] %v792
    %809 = vst [vmem:[#allocation11 + $0x70] sm:$0xff] %v793
    %810 = vst [vmem:[#allocation11 + $0x78] sm:$0xff] %v794
    // Predicated region
    $region42: #{tpu_custom_call.1} parent=1 // pred_check
      _
    $region43: #{tpu_custom_call.1} parent=1 // pred_check_branch
      %812 = sbr.rel (0) target = $region45
    $region44: #{tpu_custom_call.1} parent=1 // pred_region
      %814 = vsyncadd [#allocation4], 0
      %s815 = sshll.u32 [#allocation11], 4
      %s816 = int_to_ptr.vmem [resolvable:$true] %s815
      %s817 = sshll.u32 %s5, 4
      %s818 = int_to_ptr.hbm [resolvable:$true] %s817
      %823 = dma.vmem_to_hbm [thread:$0]  %s816, 2048, %s818, [#allocation4], 256, 256, 16
    $region45: #{tpu_custom_call.1} parent=1 // pred_fallthru
      _
    // Predicated region
    $region46: #{tpu_custom_call.1} parent=1 // pred_check
      _
    $region47: #{tpu_custom_call.1} parent=1 // pred_check_branch
      %825 = sbr.rel (0) target = $region49
    $region48: #{tpu_custom_call.1} parent=1 // pred_region
      %827 = dma.done [#allocation4], 2048
    $region49: #{tpu_custom_call.1} parent=1 // pred_fallthru
      _
    %828 = vsyncpa [#allocation3], 1
    %829 = vsyncpa [#allocation6], 1
    %830 = vsyncpa [#allocation9], 1
    %831 = vsyncpa [#allocation4], 1

// kernel: tpu_custom_call.1
$region0: #{tpu_custom_call.1}
  #allocation0 [shape = 'u32[]', space=smem, size = 0x4, offset = 0x4, fixed_abs, tag = 'smem constant byte address 0x4 - core index']
  #allocation1 [shape = 'u32[72,128]{1,0:T(1,128)}', space=vmem, size = 0x9000, scoped, tag = 'internal scratch']
  %s0 = inlined_call_operand.hbm [shape: f32[64,128], index: 0, kind: input, shape index: {}]
  %s1 = inlined_call_operand.hbm [shape: f32[64,128], index: 1, kind: input, shape index: {}]
  %s2 = inlined_call_operand.hbm [shape: f32[1,512], index: 2, kind: input, shape index: {}]
  %s3 = inlined_call_operand.hbm [shape: bf16[128,512], index: 3, kind: input, shape index: {}]
  %s4 = inlined_call_operand.hbm [shape: bf16[128,512], index: 4, kind: input, shape index: {}]
  %s5 = inlined_call_operand.hbm [shape: bf16[64,512], index: 5, kind: output, shape index: {}]
  %s6 = sld [smem:[#allocation0]]
  $region50: #{tpu_custom_call.1} parent=0
    _
  %s8 = ssub.s32 1, %s6
  %s9 = scalar_select 0, %s8, %s6
  $region1: #{tpu_custom_call.1} parent=0
    #allocation2 [shape = 'u8[32768]{0}', space=vmem, size = 0x8000, scoped, tag = 'input window, operand 0, single buffered']
    #allocation3 [shape = 's32[1]{0}', space=sflag, size = 0x4, scoped, tag = 'scoped memory for tpu_custom_call.1']
    #allocation4 [shape = 's32[1]{0}', space=sflag, size = 0x4, scoped, tag = 'scoped memory for tpu_custom_call.1']
    #allocation5 [shape = 'u8[32768]{0}', space=vmem, size = 0x8000, scoped, tag = 'input window, operand 1, single buffered']
    #allocation6 [shape = 's32[1]{0}', space=sflag, size = 0x4, scoped, tag = 'scoped memory for tpu_custom_call.1']
    #allocation7 [shape = 'u8[2048]{0}', space=vmem, size = 0x800, scoped, tag = 'input window, operand 2, single buffered']
    #allocation8 [shape = 'u8[131072]{0}', space=vmem, size = 0x20000, scoped, tag = 'input window, operand 3, single buffered']
    #allocation9 [shape = 's32[1]{0}', space=sflag, size = 0x4, scoped, tag = 'scoped memory for tpu_custom_call.1']
    #allocation10 [shape = 'u8[131072]{0}', space=vmem, size = 0x20000, scoped, tag = 'input window, operand 4, single buffered']
    #allocation11 [shape = 'u8[65536]{0}', space=vmem, size = 0x10000, scoped, tag = 'output window, operand 0, single buffered']
    %10 = vsyncpa [#allocation3], 0
    %11 = vsyncpa [#allocation6], 0
    %12 = vsyncpa [#allocation9], 0
    %13 = vsyncpa [#allocation4], 0
    // Predicated region
    $region2: #{tpu_custom_call.1} parent=1 // pred_check
      _
    $region3: #{tpu_custom_call.1} parent=1 // pred_check_branch
      %15 = sbr.rel (0) target = $region5
    $region4: #{tpu_custom_call.1} parent=1 // pred_region
      %17 = vsyncadd [#allocation3], 0
      %s18 = sshll.u32 %s0, 4
      %s19 = int_to_ptr.hbm [resolvable:$true] %s18
      %s20 = sshll.u32 [#allocation2], 4
      %s21 = int_to_ptr.vmem [resolvable:$true] %s20
      %26 = dma.hbm_to_vmem [thread:$0]  %s19, 1024, %s21, [#allocation3], 128, 128, 8
    $region5: #{tpu_custom_call.1} parent=1 // pred_fallthru
      _
    // Predicated region
    $region6: #{tpu_custom_call.1} parent=1 // pred_check
      _
    $region7: #{tpu_custom_call.1} parent=1 // pred_check_branch
      %28 = sbr.rel (0) target = $region9
    $region8: #{tpu_custom_call.1} parent=1 // pred_region
      %30 = vsyncadd [#allocation6], 0
      %s31 = sshll.u32 %s1, 4
      %s32 = int_to_ptr.hbm [resolvable:$true] %s31
      %s33 = sshll.u32 [#allocation5], 4
      %s34 = int_to_ptr.vmem [resolvable:$true] %s33
      %39 = dma.hbm_to_vmem [thread:$0]  %s32, 1024, %s34, [#allocation6], 128, 128, 8
    $region9: #{tpu_custom_call.1} parent=1 // pred_fallthru
      _
    // Predicated region
    $region10: #{tpu_custom_call.1} parent=1 // pred_check
      _
    $region11: #{tpu_custom_call.1} parent=1 // pred_check_branch
      %41 = sbr.rel (0) target = $region13
    $region12: #{tpu_custom_call.1} parent=1 // pred_region
      %43 = vsyncadd [#allocation6], 0
      %s45 = sshll.u32 %s2, 4
      %s46 = int_to_ptr.hbm [resolvable:$true] %s45
      %s47 = sshll.u32 [#allocation7], 4
      %s48 = int_to_ptr.vmem [resolvable:$true] %s47
      %50 = dma.hbm_to_vmem [thread:$0]  %s46, 64, %s48, [#allocation6]
    $region13: #{tpu_custom_call.1} parent=1 // pred_fallthru
      _
    // Predicated region
    $region14: #{tpu_custom_call.1} parent=1 // pred_check
      _
    $region15: #{tpu_custom_call.1} parent=1 // pred_check_branch
      %52 = sbr.rel (0) target = $region17
    $region16: #{tpu_custom_call.1} parent=1 // pred_region
      %54 = vsyncadd [#allocation9], 0
      %s55 = sshll.u32 %s3, 4
      %s56 = int_to_ptr.hbm [resolvable:$true] %s55
      %s57 = sshll.u32 [#allocation8], 4
      %s58 = int_to_ptr.vmem [resolvable:$true] %s57
      %63 = dma.hbm_to_vmem [thread:$0]  %s56, 4096, %s58, [#allocation9], 256, 256, 16
    $region17: #{tpu_custom_call.1} parent=1 // pred_fallthru
      _
    // Predicated region
    $region18: #{tpu_custom_call.1} parent=1 // pred_check
      _
    $region19: #{tpu_custom_call.1} parent=1 // pred_check_branch
      %65 = sbr.rel (0) target = $region21
    $region20: #{tpu_custom_call.1} parent=1 // pred_region
      %67 = vsyncadd [#allocation9], 0
      %s68 = sshll.u32 %s4, 4
      %s69 = int_to_ptr.hbm [resolvable:$true] %s68
      %s70 = sshll.u32 [#allocation10], 4
      %s71 = int_to_ptr.vmem [resolvable:$true] %s70
      %76 = dma.hbm_to_vmem [thread:$0]  %s69, 4096, %s71, [#allocation9], 256, 256, 16
    $region21: #{tpu_custom_call.1} parent=1 // pred_fallthru
      _
    // Predicated region
    $region22: #{tpu_custom_call.1} parent=1 // pred_check
      _
    $region23: #{tpu_custom_call.1} parent=1 // pred_check_branch
      %78 = sbr.rel (0) target = $region25
    $region24: #{tpu_custom_call.1} parent=1 // pred_region
      %80 = dma.done [#allocation3], 1024
    $region25: #{tpu_custom_call.1} parent=1 // pred_fallthru
      _
    // Predicated region
    $region26: #{tpu_custom_call.1} parent=1 // pred_check
      _
    $region27: #{tpu_custom_call.1} parent=1 // pred_check_branch
      %82 = sbr.rel (0) target = $region29
    $region28: #{tpu_custom_call.1} parent=1 // pred_region
      %84 = dma.done [#allocation6], 1024
    $region29: #{tpu_custom_call.1} parent=1 // pred_fallthru
      _
    // Predicated region
    $region30: #{tpu_custom_call.1} parent=1 // pred_check
      _
    $region31: #{tpu_custom_call.1} parent=1 // pred_check_branch
      %86 = sbr.rel (0) target = $region33
    $region32: #{tpu_custom_call.1} parent=1 // pred_region
      %88 = dma.done [#allocation6], 64
    $region33: #{tpu_custom_call.1} parent=1 // pred_fallthru
      _
    // Predicated region
    $region34: #{tpu_custom_call.1} parent=1 // pred_check
      _
    $region35: #{tpu_custom_call.1} parent=1 // pred_check_branch
      %90 = sbr.rel (0) target = $region37
    $region36: #{tpu_custom_call.1} parent=1 // pred_region
      %92 = dma.done [#allocation9], 4096
    $region37: #{tpu_custom_call.1} parent=1 // pred_fallthru
      _
    // Predicated region
    $region38: #{tpu_custom_call.1} parent=1 // pred_check
      _
    $region39: #{tpu_custom_call.1} parent=1 // pred_check_branch
      %94 = sbr.rel (0) target = $region41
    $region40: #{tpu_custom_call.1} parent=1 // pred_region
      %96 = dma.done [#allocation9], 4096
    $region41: #{tpu_custom_call.1} parent=1 // pred_fallthru
      _
    %v97 = vld [vmem:[#allocation2] sm:$0xff]
    %v98 = vld [vmem:[#allocation2 + $0x8] sm:$0xff]
    %v99 = vld [vmem:[#allocation2 + $0x10] sm:$0xff]
    %v100 = vld [vmem:[#allocation2 + $0x18] sm:$0xff]
    %v101 = vld [vmem:[#allocation2 + $0x20] sm:$0xff]
    %v102 = vld [vmem:[#allocation2 + $0x28] sm:$0xff]
    %v103 = vld [vmem:[#allocation2 + $0x30] sm:$0xff]
    %v104 = vld [vmem:[#allocation2 + $0x38] sm:$0xff]
    %v105 = vpack.c.bf16 %v98, %v97
    %v106 = vpack.c.bf16 %v100, %v99
    %v107 = vpack.c.bf16 %v102, %v101
    %v108 = vpack.c.bf16 %v104, %v103
    %v109 = vld [vmem:[#allocation5] sm:$0xff]
    %v110 = vld [vmem:[#allocation5 + $0x8] sm:$0xff]
    %v111 = vld [vmem:[#allocation5 + $0x10] sm:$0xff]
    %v112 = vld [vmem:[#allocation5 + $0x18] sm:$0xff]
    %v113 = vld [vmem:[#allocation5 + $0x20] sm:$0xff]
    %v114 = vld [vmem:[#allocation5 + $0x28] sm:$0xff]
    %v115 = vld [vmem:[#allocation5 + $0x30] sm:$0xff]
    %v116 = vld [vmem:[#allocation5 + $0x38] sm:$0xff]
    %v117 = vpack.c.bf16 %v110, %v109
    %v118 = vpack.c.bf16 %v112, %v111
    %v119 = vpack.c.bf16 %v114, %v113
    %v120 = vpack.c.bf16 %v116, %v115
    %v121 = vld [vmem:[#allocation8] sm:$0xff]
    %v122 = vld [vmem:[#allocation8 + $0x8] sm:$0xff]
    %v123 = vld [vmem:[#allocation8 + $0x10] sm:$0xff]
    %v124 = vld [vmem:[#allocation8 + $0x18] sm:$0xff]
    %v125 = vld [vmem:[#allocation8 + $0x20] sm:$0xff]
    %v126 = vld [vmem:[#allocation8 + $0x28] sm:$0xff]
    %v127 = vld [vmem:[#allocation8 + $0x30] sm:$0xff]
    %v128 = vld [vmem:[#allocation8 + $0x38] sm:$0xff]
    %v129 = vld [vmem:[#allocation8 + $0x40] sm:$0xff]
    %v130 = vld [vmem:[#allocation8 + $0x48] sm:$0xff]
    %v131 = vld [vmem:[#allocation8 + $0x50] sm:$0xff]
    %v132 = vld [vmem:[#allocation8 + $0x58] sm:$0xff]
    %v133 = vld [vmem:[#allocation8 + $0x60] sm:$0xff]
    %v134 = vld [vmem:[#allocation8 + $0x68] sm:$0xff]
    %v135 = vld [vmem:[#allocation8 + $0x70] sm:$0xff]
    %v136 = vld [vmem:[#allocation8 + $0x78] sm:$0xff]
    %v137 = vld [vmem:[#allocation8 + $0x80] sm:$0xff]
    %v138 = vld [vmem:[#allocation8 + $0x88] sm:$0xff]
    %v139 = vld [vmem:[#allocation8 + $0x90] sm:$0xff]
    %v140 = vld [vmem:[#allocation8 + $0x98] sm:$0xff]
    %v141 = vld [vmem:[#allocation8 + $0xa0] sm:$0xff]
    %v142 = vld [vmem:[#allocation8 + $0xa8] sm:$0xff]
    %v143 = vld [vmem:[#allocation8 + $0xb0] sm:$0xff]
    %v144 = vld [vmem:[#allocation8 + $0xb8] sm:$0xff]
    %v145 = vld [vmem:[#allocation8 + $0xc0] sm:$0xff]
    %v146 = vld [vmem:[#allocation8 + $0xc8] sm:$0xff]
    %v147 = vld [vmem:[#allocation8 + $0xd0] sm:$0xff]
    %v148 = vld [vmem:[#allocation8 + $0xd8] sm:$0xff]
    %v149 = vld [vmem:[#allocation8 + $0xe0] sm:$0xff]
    %v150 = vld [vmem:[#allocation8 + $0xe8] sm:$0xff]
    %v151 = vld [vmem:[#allocation8 + $0xf0] sm:$0xff]
    %v152 = vld [vmem:[#allocation8 + $0xf8] sm:$0xff]
    %v153 = vld [vmem:[#allocation10] sm:$0xff]
    %v154 = vld [vmem:[#allocation10 + $0x8] sm:$0xff]
    %v155 = vld [vmem:[#allocation10 + $0x10] sm:$0xff]
    %v156 = vld [vmem:[#allocation10 + $0x18] sm:$0xff]
    %v157 = vld [vmem:[#allocation10 + $0x20] sm:$0xff]
    %v158 = vld [vmem:[#allocation10 + $0x28] sm:$0xff]
    %v159 = vld [vmem:[#allocation10 + $0x30] sm:$0xff]
    %v160 = vld [vmem:[#allocation10 + $0x38] sm:$0xff]
    %v161 = vld [vmem:[#allocation10 + $0x40] sm:$0xff]
    %v162 = vld [vmem:[#allocation10 + $0x48] sm:$0xff]
    %v163 = vld [vmem:[#allocation10 + $0x50] sm:$0xff]
    %v164 = vld [vmem:[#allocation10 + $0x58] sm:$0xff]
    %v165 = vld [vmem:[#allocation10 + $0x60] sm:$0xff]
    %v166 = vld [vmem:[#allocation10 + $0x68] sm:$0xff]
    %v167 = vld [vmem:[#allocation10 + $0x70] sm:$0xff]
    %v168 = vld [vmem:[#allocation10 + $0x78] sm:$0xff]
    %v169 = vld [vmem:[#allocation10 + $0x80] sm:$0xff]
    %v170 = vld [vmem:[#allocation10 + $0x88] sm:$0xff]
    %v171 = vld [vmem:[#allocation10 + $0x90] sm:$0xff]
    %v172 = vld [vmem:[#allocation10 + $0x98] sm:$0xff]
    %v173 = vld [vmem:[#allocation10 + $0xa0] sm:$0xff]
    %v174 = vld [vmem:[#allocation10 + $0xa8] sm:$0xff]
    %v175 = vld [vmem:[#allocation10 + $0xb0] sm:$0xff]
    %v176 = vld [vmem:[#allocation10 + $0xb8] sm:$0xff]
    %v177 = vld [vmem:[#allocation10 + $0xc0] sm:$0xff]
    %v178 = vld [vmem:[#allocation10 + $0xc8] sm:$0xff]
    %v179 = vld [vmem:[#allocation10 + $0xd0] sm:$0xff]
    %v180 = vld [vmem:[#allocation10 + $0xd8] sm:$0xff]
    %v181 = vld [vmem:[#allocation10 + $0xe0] sm:$0xff]
    %v182 = vld [vmem:[#allocation10 + $0xe8] sm:$0xff]
    %v183 = vld [vmem:[#allocation10 + $0xf0] sm:$0xff]
    %v184 = vld [vmem:[#allocation10 + $0xf8] sm:$0xff]
    %v217 = vunpack.c.l.b16 %v153
    %v218 = vunpack.c.h.b16 %v153
    %v219 = vunpack.c.l.b16 %v154
    %v220 = vunpack.c.h.b16 %v154
    %v221 = vunpack.c.l.b16 %v155
    %v222 = vunpack.c.h.b16 %v155
    %v223 = vunpack.c.l.b16 %v156
    %v224 = vunpack.c.h.b16 %v156
    %v225 = vunpack.c.l.b16 %v157
    %v226 = vunpack.c.h.b16 %v157
    %v227 = vunpack.c.l.b16 %v158
    %v228 = vunpack.c.h.b16 %v158
    %v229 = vunpack.c.l.b16 %v159
    %v230 = vunpack.c.h.b16 %v159
    %v231 = vunpack.c.l.b16 %v160
    %v232 = vunpack.c.h.b16 %v160
    %v233 = vunpack.c.l.b16 %v161
    %v234 = vunpack.c.h.b16 %v161
    %v235 = vunpack.c.l.b16 %v162
    %v236 = vunpack.c.h.b16 %v162
    %v237 = vunpack.c.l.b16 %v163
    %v238 = vunpack.c.h.b16 %v163
    %v239 = vunpack.c.l.b16 %v164
    %v240 = vunpack.c.h.b16 %v164
    %v241 = vunpack.c.l.b16 %v165
    %v242 = vunpack.c.h.b16 %v165
    %v243 = vunpack.c.l.b16 %v166
    %v244 = vunpack.c.h.b16 %v166
    %v245 = vunpack.c.l.b16 %v167
    %v246 = vunpack.c.h.b16 %v167
    %v247 = vunpack.c.l.b16 %v168
    %v248 = vunpack.c.h.b16 %v168
    %v249 = vunpack.c.l.b16 %v169
    %v250 = vunpack.c.h.b16 %v169
    %v251 = vunpack.c.l.b16 %v170
    %v252 = vunpack.c.h.b16 %v170
    %v253 = vunpack.c.l.b16 %v171
    %v254 = vunpack.c.h.b16 %v171
    %v255 = vunpack.c.l.b16 %v172
    %v256 = vunpack.c.h.b16 %v172
    %v257 = vunpack.c.l.b16 %v173
    %v258 = vunpack.c.h.b16 %v173
    %v259 = vunpack.c.l.b16 %v174
    %v260 = vunpack.c.h.b16 %v174
    %v261 = vunpack.c.l.b16 %v175
    %v262 = vunpack.c.h.b16 %v175
    %v263 = vunpack.c.l.b16 %v176
    %v264 = vunpack.c.h.b16 %v176
    %v265 = vunpack.c.l.b16 %v177
    %v266 = vunpack.c.h.b16 %v177
    %v267 = vunpack.c.l.b16 %v178
    %v268 = vunpack.c.h.b16 %v178
    %v269 = vunpack.c.l.b16 %v179
    %v270 = vunpack.c.h.b16 %v179
    %v271 = vunpack.c.l.b16 %v180
    %v272 = vunpack.c.h.b16 %v180
    %v273 = vunpack.c.l.b16 %v181
    %v274 = vunpack.c.h.b16 %v181
    %v275 = vunpack.c.l.b16 %v182
    %v276 = vunpack.c.h.b16 %v182
    %v277 = vunpack.c.l.b16 %v183
    %v278 = vunpack.c.h.b16 %v183
    %v279 = vunpack.c.l.b16 %v184
    %v280 = vunpack.c.h.b16 %v184
    %v281 = vpack.c.b16 %v221, %v217
    %v282 = vpack.c.b16 %v222, %v218
    %v283 = vpack.c.b16 %v223, %v219
    %v284 = vpack.c.b16 %v224, %v220
    %v285 = vpack.c.b16 %v229, %v225
    %v286 = vpack.c.b16 %v230, %v226
    %v287 = vpack.c.b16 %v231, %v227
    %v288 = vpack.c.b16 %v232, %v228
    %v289 = vpack.c.b16 %v237, %v233
    %v290 = vpack.c.b16 %v238, %v234
    %v291 = vpack.c.b16 %v239, %v235
    %v292 = vpack.c.b16 %v240, %v236
    %v293 = vpack.c.b16 %v245, %v241
    %v294 = vpack.c.b16 %v246, %v242
    %v295 = vpack.c.b16 %v247, %v243
    %v296 = vpack.c.b16 %v248, %v244
    %v297 = vpack.c.b16 %v253, %v249
    %v298 = vpack.c.b16 %v254, %v250
    %v299 = vpack.c.b16 %v255, %v251
    %v300 = vpack.c.b16 %v256, %v252
    %v301 = vpack.c.b16 %v261, %v257
    %v302 = vpack.c.b16 %v262, %v258
    %v303 = vpack.c.b16 %v263, %v259
    %v304 = vpack.c.b16 %v264, %v260
    %v305 = vpack.c.b16 %v269, %v265
    %v306 = vpack.c.b16 %v270, %v266
    %v307 = vpack.c.b16 %v271, %v267
    %v308 = vpack.c.b16 %v272, %v268
    %v309 = vpack.c.b16 %v277, %v273
    %v310 = vpack.c.b16 %v278, %v274
    %v311 = vpack.c.b16 %v279, %v275
    %v312 = vpack.c.b16 %v280, %v276
    %345 = vmatpush.bf16.msra.mxu0 %v309
    %346 = vmatpush.bf16.msra.mxu0 %v305
    %347 = vmatpush.bf16.msra.mxu0 %v301
    %348 = vmatpush.bf16.msra.mxu0 %v297
    %349 = vmatpush.bf16.msra.mxu0 %v293
    %350 = vmatpush.bf16.msra.mxu0 %v289
    %351 = vmatpush.bf16.msra.mxu0 %v285
    %352 = vmatpush.bf16.msra.mxu0 %v281
    %353 = vmatmul.bf16.gmra.mxu0 %v117
    %v354 = vpop.f32.mrf.mxu0
    %v355 = vadd.f32 0.0, %v354
    %v356 = vpop.f32.mrf.mxu0
    %v357 = vadd.f32 0.0, %v356
    %358 = vmatmul.bf16.gmra.mxu0 %v118
    %v359 = vpop.f32.mrf.mxu0
    %v360 = vadd.f32 0.0, %v359
    %v361 = vpop.f32.mrf.mxu0
    %v362 = vadd.f32 0.0, %v361
    %363 = vmatmul.bf16.gmra.mxu0 %v119
    %v364 = vpop.f32.mrf.mxu0
    %v365 = vadd.f32 0.0, %v364
    %v366 = vpop.f32.mrf.mxu0
    %v367 = vadd.f32 0.0, %v366
    %368 = vmatmul.bf16.gmra.mxu0 %v120
    %v369 = vpop.f32.mrf.mxu0
    %v370 = vadd.f32 0.0, %v369
    %v371 = vpop.f32.mrf.mxu0
    %v372 = vadd.f32 0.0, %v371
    %373 = vdwg.mxu0
    %374 = vmatpush.bf16.msra.mxu0 %v310
    %375 = vmatpush.bf16.msra.mxu0 %v306
    %376 = vmatpush.bf16.msra.mxu0 %v302
    %377 = vmatpush.bf16.msra.mxu0 %v298
    %378 = vmatpush.bf16.msra.mxu0 %v294
    %379 = vmatpush.bf16.msra.mxu0 %v290
    %380 = vmatpush.bf16.msra.mxu0 %v286
    %381 = vmatpush.bf16.msra.mxu0 %v282
    %382 = vmatmul.bf16.gmra.mxu0 %v117
    %v383 = vpop.f32.mrf.mxu0
    %v384 = vadd.f32 0.0, %v383
    %v385 = vpop.f32.mrf.mxu0
    %v386 = vadd.f32 0.0, %v385
    %387 = vmatmul.bf16.gmra.mxu0 %v118
    %v388 = vpop.f32.mrf.mxu0
    %v389 = vadd.f32 0.0, %v388
    %v390 = vpop.f32.mrf.mxu0
    %v391 = vadd.f32 0.0, %v390
    %392 = vmatmul.bf16.gmra.mxu0 %v119
    %v393 = vpop.f32.mrf.mxu0
    %v394 = vadd.f32 0.0, %v393
    %v395 = vpop.f32.mrf.mxu0
    %v396 = vadd.f32 0.0, %v395
    %397 = vmatmul.bf16.gmra.mxu0 %v120
    %v398 = vpop.f32.mrf.mxu0
    %v399 = vadd.f32 0.0, %v398
    %v400 = vpop.f32.mrf.mxu0
    %v401 = vadd.f32 0.0, %v400
    %402 = vdwg.mxu0
    %403 = vmatpush.bf16.msra.mxu0 %v311
    %404 = vmatpush.bf16.msra.mxu0 %v307
    %405 = vmatpush.bf16.msra.mxu0 %v303
    %406 = vmatpush.bf16.msra.mxu0 %v299
    %407 = vmatpush.bf16.msra.mxu0 %v295
    %408 = vmatpush.bf16.msra.mxu0 %v291
    %409 = vmatpush.bf16.msra.mxu0 %v287
    %410 = vmatpush.bf16.msra.mxu0 %v283
    %411 = vmatmul.bf16.gmra.mxu0 %v117
    %v412 = vpop.f32.mrf.mxu0
    %v413 = vadd.f32 0.0, %v412
    %v414 = vpop.f32.mrf.mxu0
    %v415 = vadd.f32 0.0, %v414
    %416 = vmatmul.bf16.gmra.mxu0 %v118
    %v417 = vpop.f32.mrf.mxu0
    %v418 = vadd.f32 0.0, %v417
    %v419 = vpop.f32.mrf.mxu0
    %v420 = vadd.f32 0.0, %v419
    %421 = vmatmul.bf16.gmra.mxu0 %v119
    %v422 = vpop.f32.mrf.mxu0
    %v423 = vadd.f32 0.0, %v422
    %v424 = vpop.f32.mrf.mxu0
    %v425 = vadd.f32 0.0, %v424
    %426 = vmatmul.bf16.gmra.mxu0 %v120
    %v427 = vpop.f32.mrf.mxu0
    %v428 = vadd.f32 0.0, %v427
    %v429 = vpop.f32.mrf.mxu0
    %v430 = vadd.f32 0.0, %v429
    %431 = vdwg.mxu0
    %432 = vmatpush.bf16.msra.mxu0 %v312
    %433 = vmatpush.bf16.msra.mxu0 %v308
    %434 = vmatpush.bf16.msra.mxu0 %v304
    %435 = vmatpush.bf16.msra.mxu0 %v300
    %436 = vmatpush.bf16.msra.mxu0 %v296
    %437 = vmatpush.bf16.msra.mxu0 %v292
    %438 = vmatpush.bf16.msra.mxu0 %v288
    %439 = vmatpush.bf16.msra.mxu0 %v284
    %440 = vmatmul.bf16.gmra.mxu0 %v117
    %v441 = vpop.f32.mrf.mxu0
    %v442 = vadd.f32 0.0, %v441
    %v443 = vpop.f32.mrf.mxu0
    %v444 = vadd.f32 0.0, %v443
    %445 = vmatmul.bf16.gmra.mxu0 %v118
    %v446 = vpop.f32.mrf.mxu0
    %v447 = vadd.f32 0.0, %v446
    %v448 = vpop.f32.mrf.mxu0
    %v449 = vadd.f32 0.0, %v448
    %450 = vmatmul.bf16.gmra.mxu0 %v119
    %v451 = vpop.f32.mrf.mxu0
    %v452 = vadd.f32 0.0, %v451
    %v453 = vpop.f32.mrf.mxu0
    %v454 = vadd.f32 0.0, %v453
    %455 = vmatmul.bf16.gmra.mxu0 %v120
    %v456 = vpop.f32.mrf.mxu0
    %v457 = vadd.f32 0.0, %v456
    %v458 = vpop.f32.mrf.mxu0
    %v459 = vadd.f32 0.0, %v458
    %460 = vdwg.mxu0
    %v493 = vunpack.c.l.b16 %v121
    %v494 = vunpack.c.h.b16 %v121
    %v495 = vunpack.c.l.b16 %v122
    %v496 = vunpack.c.h.b16 %v122
    %v497 = vunpack.c.l.b16 %v123
    %v498 = vunpack.c.h.b16 %v123
    %v499 = vunpack.c.l.b16 %v124
    %v500 = vunpack.c.h.b16 %v124
    %v501 = vunpack.c.l.b16 %v125
    %v502 = vunpack.c.h.b16 %v125
    %v503 = vunpack.c.l.b16 %v126
    %v504 = vunpack.c.h.b16 %v126
    %v505 = vunpack.c.l.b16 %v127
    %v506 = vunpack.c.h.b16 %v127
    %v507 = vunpack.c.l.b16 %v128
    %v508 = vunpack.c.h.b16 %v128
    %v509 = vunpack.c.l.b16 %v129
    %v510 = vunpack.c.h.b16 %v129
    %v511 = vunpack.c.l.b16 %v130
    %v512 = vunpack.c.h.b16 %v130
    %v513 = vunpack.c.l.b16 %v131
    %v514 = vunpack.c.h.b16 %v131
    %v515 = vunpack.c.l.b16 %v132
    %v516 = vunpack.c.h.b16 %v132
    %v517 = vunpack.c.l.b16 %v133
    %v518 = vunpack.c.h.b16 %v133
    %v519 = vunpack.c.l.b16 %v134
    %v520 = vunpack.c.h.b16 %v134
    %v521 = vunpack.c.l.b16 %v135
    %v522 = vunpack.c.h.b16 %v135
    %v523 = vunpack.c.l.b16 %v136
    %v524 = vunpack.c.h.b16 %v136
    %v525 = vunpack.c.l.b16 %v137
    %v526 = vunpack.c.h.b16 %v137
    %v527 = vunpack.c.l.b16 %v138
    %v528 = vunpack.c.h.b16 %v138
    %v529 = vunpack.c.l.b16 %v139
    %v530 = vunpack.c.h.b16 %v139
    %v531 = vunpack.c.l.b16 %v140
    %v532 = vunpack.c.h.b16 %v140
    %v533 = vunpack.c.l.b16 %v141
    %v534 = vunpack.c.h.b16 %v141
    %v535 = vunpack.c.l.b16 %v142
    %v536 = vunpack.c.h.b16 %v142
    %v537 = vunpack.c.l.b16 %v143
    %v538 = vunpack.c.h.b16 %v143
    %v539 = vunpack.c.l.b16 %v144
    %v540 = vunpack.c.h.b16 %v144
    %v541 = vunpack.c.l.b16 %v145
    %v542 = vunpack.c.h.b16 %v145
    %v543 = vunpack.c.l.b16 %v146
    %v544 = vunpack.c.h.b16 %v146
    %v545 = vunpack.c.l.b16 %v147
    %v546 = vunpack.c.h.b16 %v147
    %v547 = vunpack.c.l.b16 %v148
    %v548 = vunpack.c.h.b16 %v148
    %v549 = vunpack.c.l.b16 %v149
    %v550 = vunpack.c.h.b16 %v149
    %v551 = vunpack.c.l.b16 %v150
    %v552 = vunpack.c.h.b16 %v150
    %v553 = vunpack.c.l.b16 %v151
    %v554 = vunpack.c.h.b16 %v151
    %v555 = vunpack.c.l.b16 %v152
    %v556 = vunpack.c.h.b16 %v152
    %v557 = vpack.c.b16 %v497, %v493
    %v558 = vpack.c.b16 %v498, %v494
    %v559 = vpack.c.b16 %v499, %v495
    %v560 = vpack.c.b16 %v500, %v496
    %v561 = vpack.c.b16 %v505, %v501
    %v562 = vpack.c.b16 %v506, %v502
    %v563 = vpack.c.b16 %v507, %v503
    %v564 = vpack.c.b16 %v508, %v504
    %v565 = vpack.c.b16 %v513, %v509
    %v566 = vpack.c.b16 %v514, %v510
    %v567 = vpack.c.b16 %v515, %v511
    %v568 = vpack.c.b16 %v516, %v512
    %v569 = vpack.c.b16 %v521, %v517
    %v570 = vpack.c.b16 %v522, %v518
    %v571 = vpack.c.b16 %v523, %v519
    %v572 = vpack.c.b16 %v524, %v520
    %v573 = vpack.c.b16 %v529, %v525
    %v574 = vpack.c.b16 %v530, %v526
    %v575 = vpack.c.b16 %v531, %v527
    %v576 = vpack.c.b16 %v532, %v528
    %v577 = vpack.c.b16 %v537, %v533
    %v578 = vpack.c.b16 %v538, %v534
    %v579 = vpack.c.b16 %v539, %v535
    %v580 = vpack.c.b16 %v540, %v536
    %v581 = vpack.c.b16 %v545, %v541
    %v582 = vpack.c.b16 %v546, %v542
    %v583 = vpack.c.b16 %v547, %v543
    %v584 = vpack.c.b16 %v548, %v544
    %v585 = vpack.c.b16 %v553, %v549
    %v586 = vpack.c.b16 %v554, %v550
    %v587 = vpack.c.b16 %v555, %v551
    %v588 = vpack.c.b16 %v556, %v552
    %621 = vmatpush.bf16.msra.mxu0 %v585
    %622 = vmatpush.bf16.msra.mxu0 %v581
    %623 = vmatpush.bf16.msra.mxu0 %v577
    %624 = vmatpush.bf16.msra.mxu0 %v573
    %625 = vmatpush.bf16.msra.mxu0 %v569
    %626 = vmatpush.bf16.msra.mxu0 %v565
    %627 = vmatpush.bf16.msra.mxu0 %v561
    %628 = vmatpush.bf16.msra.mxu0 %v557
    %629 = vmatmul.bf16.gmra.mxu0 %v105
    %v630 = vpop.f32.mrf.mxu0
    %v631 = vadd.f32 %v355, %v630
    %v632 = vpop.f32.mrf.mxu0
    %v633 = vadd.f32 %v357, %v632
    %634 = vmatmul.bf16.gmra.mxu0 %v106
    %v635 = vpop.f32.mrf.mxu0
    %v636 = vadd.f32 %v360, %v635
    %v637 = vpop.f32.mrf.mxu0
    %v638 = vadd.f32 %v362, %v637
    %639 = vmatmul.bf16.gmra.mxu0 %v107
    %v640 = vpop.f32.mrf.mxu0
    %v641 = vadd.f32 %v365, %v640
    %v642 = vpop.f32.mrf.mxu0
    %v643 = vadd.f32 %v367, %v642
    %644 = vmatmul.bf16.gmra.mxu0 %v108
    %v645 = vpop.f32.mrf.mxu0
    %v646 = vadd.f32 %v370, %v645
    %v647 = vpop.f32.mrf.mxu0
    %v648 = vadd.f32 %v372, %v647
    %649 = vdwg.mxu0
    %650 = vmatpush.bf16.msra.mxu0 %v586
    %651 = vmatpush.bf16.msra.mxu0 %v582
    %652 = vmatpush.bf16.msra.mxu0 %v578
    %653 = vmatpush.bf16.msra.mxu0 %v574
    %654 = vmatpush.bf16.msra.mxu0 %v570
    %655 = vmatpush.bf16.msra.mxu0 %v566
    %656 = vmatpush.bf16.msra.mxu0 %v562
    %657 = vmatpush.bf16.msra.mxu0 %v558
    %658 = vmatmul.bf16.gmra.mxu0 %v105
    %v659 = vpop.f32.mrf.mxu0
    %v660 = vadd.f32 %v384, %v659
    %v661 = vpop.f32.mrf.mxu0
    %v662 = vadd.f32 %v386, %v661
    %663 = vmatmul.bf16.gmra.mxu0 %v106
    %v664 = vpop.f32.mrf.mxu0
    %v665 = vadd.f32 %v389, %v664
    %v666 = vpop.f32.mrf.mxu0
    %v667 = vadd.f32 %v391, %v666
    %668 = vmatmul.bf16.gmra.mxu0 %v107
    %v669 = vpop.f32.mrf.mxu0
    %v670 = vadd.f32 %v394, %v669
    %v671 = vpop.f32.mrf.mxu0
    %v672 = vadd.f32 %v396, %v671
    %673 = vmatmul.bf16.gmra.mxu0 %v108
    %v674 = vpop.f32.mrf.mxu0
    %v675 = vadd.f32 %v399, %v674
    %v676 = vpop.f32.mrf.mxu0
    %v677 = vadd.f32 %v401, %v676
    %678 = vdwg.mxu0
    %679 = vmatpush.bf16.msra.mxu0 %v587
    %680 = vmatpush.bf16.msra.mxu0 %v583
    %681 = vmatpush.bf16.msra.mxu0 %v579
    %682 = vmatpush.bf16.msra.mxu0 %v575
    %683 = vmatpush.bf16.msra.mxu0 %v571
    %684 = vmatpush.bf16.msra.mxu0 %v567
    %685 = vmatpush.bf16.msra.mxu0 %v563
    %686 = vmatpush.bf16.msra.mxu0 %v559
    %687 = vmatmul.bf16.gmra.mxu0 %v105
    %v688 = vpop.f32.mrf.mxu0
    %v689 = vadd.f32 %v413, %v688
    %v690 = vpop.f32.mrf.mxu0
    %v691 = vadd.f32 %v415, %v690
    %692 = vmatmul.bf16.gmra.mxu0 %v106
    %v693 = vpop.f32.mrf.mxu0
    %v694 = vadd.f32 %v418, %v693
    %v695 = vpop.f32.mrf.mxu0
    %v696 = vadd.f32 %v420, %v695
    %697 = vmatmul.bf16.gmra.mxu0 %v107
    %v698 = vpop.f32.mrf.mxu0
    %v699 = vadd.f32 %v423, %v698
    %v700 = vpop.f32.mrf.mxu0
    %v701 = vadd.f32 %v425, %v700
    %702 = vmatmul.bf16.gmra.mxu0 %v108
    %v703 = vpop.f32.mrf.mxu0
    %v704 = vadd.f32 %v428, %v703
    %v705 = vpop.f32.mrf.mxu0
    %v706 = vadd.f32 %v430, %v705
    %707 = vdwg.mxu0
    %708 = vmatpush.bf16.msra.mxu0 %v588
    %709 = vmatpush.bf16.msra.mxu0 %v584
    %710 = vmatpush.bf16.msra.mxu0 %v580
    %711 = vmatpush.bf16.msra.mxu0 %v576
    %712 = vmatpush.bf16.msra.mxu0 %v572
    %713 = vmatpush.bf16.msra.mxu0 %v568
    %714 = vmatpush.bf16.msra.mxu0 %v564
    %715 = vmatpush.bf16.msra.mxu0 %v560
    %716 = vmatmul.bf16.gmra.mxu0 %v105
    %v717 = vpop.f32.mrf.mxu0
    %v718 = vadd.f32 %v442, %v717
    %v719 = vpop.f32.mrf.mxu0
    %v720 = vadd.f32 %v444, %v719
    %721 = vmatmul.bf16.gmra.mxu0 %v106
    %v722 = vpop.f32.mrf.mxu0
    %v723 = vadd.f32 %v447, %v722
    %v724 = vpop.f32.mrf.mxu0
    %v725 = vadd.f32 %v449, %v724
    %726 = vmatmul.bf16.gmra.mxu0 %v107
    %v727 = vpop.f32.mrf.mxu0
    %v728 = vadd.f32 %v452, %v727
    %v729 = vpop.f32.mrf.mxu0
    %v730 = vadd.f32 %v454, %v729
    %731 = vmatmul.bf16.gmra.mxu0 %v108
    %v732 = vpop.f32.mrf.mxu0
    %v733 = vadd.f32 %v457, %v732
    %v734 = vpop.f32.mrf.mxu0
    %v735 = vadd.f32 %v459, %v734
    %736 = vdwg.mxu0
    %v737 = vld [vmem:[#allocation7] sm:$0xf]
    %v739 = vperm.slane %v737, 0
    %v740 = vperm.slane %v737, 1
    %v741 = vperm.slane %v737, 2
    %v742 = vperm.slane %v737, 3
    %v747 = vadd.f32 %v631, %v739
    %v748 = vadd.f32 %v660, %v740
    %v749 = vadd.f32 %v689, %v741
    %v750 = vadd.f32 %v718, %v742
    %v751 = vadd.f32 %v633, %v739
    %v752 = vadd.f32 %v662, %v740
    %v753 = vadd.f32 %v691, %v741
    %v754 = vadd.f32 %v720, %v742
    %v755 = vadd.f32 %v636, %v739
    %v756 = vadd.f32 %v665, %v740
    %v757 = vadd.f32 %v694, %v741
    %v758 = vadd.f32 %v723, %v742
    %v759 = vadd.f32 %v638, %v739
    %v760 = vadd.f32 %v667, %v740
    %v761 = vadd.f32 %v696, %v741
    %v762 = vadd.f32 %v725, %v742
    %v763 = vadd.f32 %v641, %v739
    %v764 = vadd.f32 %v670, %v740
    %v765 = vadd.f32 %v699, %v741
    %v766 = vadd.f32 %v728, %v742
    %v767 = vadd.f32 %v643, %v739
    %v768 = vadd.f32 %v672, %v740
    %v769 = vadd.f32 %v701, %v741
    %v770 = vadd.f32 %v730, %v742
    %v771 = vadd.f32 %v646, %v739
    %v772 = vadd.f32 %v675, %v740
    %v773 = vadd.f32 %v704, %v741
    %v774 = vadd.f32 %v733, %v742
    %v775 = vadd.f32 %v648, %v739
    %v776 = vadd.f32 %v677, %v740
    %v777 = vadd.f32 %v706, %v741
    %v778 = vadd.f32 %v735, %v742
    %v779 = vpack.c.bf16 %v748, %v747
    %v780 = vpack.c.bf16 %v750, %v749
    %v781 = vpack.c.bf16 %v752, %v751
    %v782 = vpack.c.bf16 %v754, %v753
    %v783 = vpack.c.bf16 %v756, %v755
    %v784 = vpack.c.bf16 %v758, %v757
    %v785 = vpack.c.bf16 %v760, %v759
    %v786 = vpack.c.bf16 %v762, %v761
    %v787 = vpack.c.bf16 %v764, %v763
    %v788 = vpack.c.bf16 %v766, %v765
    %v789 = vpack.c.bf16 %v768, %v767
    %v790 = vpack.c.bf16 %v770, %v769
    %v791 = vpack.c.bf16 %v772, %v771
    %v792 = vpack.c.bf16 %v774, %v773
    %v793 = vpack.c.bf16 %v776, %v775
    %v794 = vpack.c.bf16 %v778, %v777
    %795 = vst [vmem:[#allocation11] sm:$0xff] %v779
    %796 = vst [vmem:[#allocation11 + $0x8] sm:$0xff] %v780
    %797 = vst [vmem:[#allocation11 + $0x10] sm:$0xff] %v781
    %798 = vst [vmem:[#allocation11 + $0x18] sm:$0xff] %v782
    %799 = vst [vmem:[#allocation11 + $0x20] sm:$0xff] %v783
    %800 = vst [vmem:[#allocation11 + $0x28] sm:$0xff] %v784
    %801 = vst [vmem:[#allocation11 + $0x30] sm:$0xff] %v785
    %802 = vst [vmem:[#allocation11 + $0x38] sm:$0xff] %v786
    %803 = vst [vmem:[#allocation11 + $0x40] sm:$0xff] %v787
    %804 = vst [vmem:[#allocation11 + $0x48] sm:$0xff] %v788
    %805 = vst [vmem:[#allocation11 + $0x50] sm:$0xff] %v789
    %806 = vst [vmem:[#allocation11 + $0x58] sm:$0xff] %v790
    %807 = vst [vmem:[#allocation11 + $0x60] sm:$0xff] %v791
    %808 = vst [vmem:[#allocation11 + $0x68] sm:$0xff] %v792
    %809 = vst [vmem:[#allocation11 + $0x70] sm:$0xff] %v793
    %810 = vst [vmem:[#allocation11 + $0x78] sm:$0xff] %v794
    // Predicated region
    $region42: #{tpu_custom_call.1} parent=1 // pred_check
      _
    $region43: #{tpu_custom_call.1} parent=1 // pred_check_branch
      %812 = sbr.rel (0) target = $region45
    $region44: #{tpu_custom_call.1} parent=1 // pred_region
      %814 = vsyncadd [#allocation4], 0
      %s815 = sshll.u32 [#allocation11], 4
      %s816 = int_to_ptr.vmem [resolvable:$true] %s815
      %s817 = sshll.u32 %s5, 4
      %s818 = int_to_ptr.hbm [resolvable:$true] %s817
      %823 = dma.vmem_to_hbm [thread:$0]  %s816, 2048, %s818, [#allocation4], 256, 256, 16
    $region45: #{tpu_custom_call.1} parent=1 // pred_fallthru
      _
    // Predicated region
    $region46: #{tpu_custom_call.1} parent=1 // pred_check
      _
    $region47: #{tpu_custom_call.1} parent=1 // pred_check_branch
      %825 = sbr.rel (0) target = $region49
    $region48: #{tpu_custom_call.1} parent=1 // pred_region
      %827 = dma.done [#allocation4], 2048
    $region49: #{tpu_custom_call.1} parent=1 // pred_fallthru
      _
    %828 = vsyncpa [#allocation3], 1
    %829 = vsyncpa [#allocation6], 1
    %830 = vsyncpa [#allocation9], 1
    %831 = vsyncpa [#allocation4], 1

</llo_original>
